<compile_context>
chip_gen: v7x
topology: tpu7x:2x2x1
jax: 0.10.0
libtpu: 0.0.40
codegen_flags: <defaults>
</compile_context>

<pallas_src>
import functools

import jax
import jax.numpy as jnp
import numpy as np
from jax.experimental import pallas as pl
from jax.experimental.pallas import tpu as pltpu


# ----------------------------- host-side constants ---------------------------

def _interp_matrix(in_size, out_size):
    """Row-stochastic 1D linear-interp matrix, align_corners=True (numpy)."""
    M = np.zeros((out_size, in_size), np.float32)
    for i in range(out_size):
        if out_size > 1 and in_size > 1:
            src = i * (in_size - 1) / (out_size - 1)
        else:
            src = 0.0
        lo = min(int(np.floor(src)), in_size - 1)
        hi = min(lo + 1, in_size - 1)
        frac = src - lo
        M[i, lo] += 1.0 - frac
        M[i, hi] += frac
    return M


def _conv_masks(H, W):
    """(9, H*W) validity masks for the 3x3 taps on the flattened spatial axis."""
    h = np.arange(H * W) // W
    w = np.arange(H * W) % W
    rows = []
    for dh in (-1, 0, 1):
        for dw in (-1, 0, 1):
            valid = ((h + dh >= 0) & (h + dh < H) &
                     (w + dw >= 0) & (w + dw < W))
            rows.append(valid.astype(np.float32))
    return np.stack(rows, axis=0)


def _im2col_weights(w_hwio):
    """HWIO (3,3,Cin,Cout) -> (Cout, 9*Cin) bf16, matching _im2col_rows order."""
    kh, kw, cin, cout = w_hwio.shape
    return w_hwio.reshape(kh * kw * cin, cout).T.astype(jnp.bfloat16)


# ------------------------------ in-kernel helpers ----------------------------

def _im2col_rows(x_cf, masks, W):
    """Build the (9*C, H*W) im2col patch matrix from a (C, H*W) activation.

    Each 3x3 tap is a static roll of the flattened spatial (lane) axis followed
    by a boundary mask (the mask zeroes both H and W wrap-around columns), so
    data never leaves the channels-on-sublanes / spatial-on-lanes layout.
    """
    # TODO(synk): jnp.roll lowers to lane slices+concat; swap in pltpu.roll
    # (XLU-native rotate) once its shift convention is pinned for this layout.
    rows = []
    t = 0
    for dh in (-1, 0, 1):
        for dw in (-1, 0, 1):
            off = dh * W + dw
            shifted = x_cf if off == 0 else jnp.roll(x_cf, -off, axis=1)
            rows.append(shifted * masks[t:t + 1])
            t += 1
    return jnp.concatenate(rows, axis=0)          # (9*C, H*W)


def _conv_bf16(patch_f32, w_ref):
    """(Cout, 9*Cin)[bf16] @ (9*Cin, H*W)[bf16] -> (Cout, H*W) f32 on the MXU."""
    return jnp.dot(w_ref[...], patch_f32.astype(jnp.bfloat16),
                   preferred_element_type=jnp.float32)


def _partial_stats(y):
    """Per-channel [sum, sum-of-squares] over the spatial (lane) axis: (C, 2)."""
    s1 = jnp.sum(y, axis=1, keepdims=True)
    s2 = jnp.sum(y * y, axis=1, keepdims=True)
    return jnp.concatenate([s1, s2], axis=1)


# --------------------------------- kernels -----------------------------------

def up_cat_conv1_kernel(x1_ref, x2_ref, kup_ref, masks_ref, w1_ref,
                        y_ref, st_ref, *, W):
    # x1_ref : (1, Cup, H1*W1) f32  coarse features, flattened spatial
    # x2_ref : (1, Cskip, HW)  f32  skip connection (already F.pad'ed, flat)
    # kup_ref: (H1*W1, HW)     f32  kron(Mh, Mw).T bilinear-upsample operator
    # masks  : (9, HW)         f32  3x3-tap boundary masks
    # w1_ref : (Cout, 9*Cin)   bf16 conv1 weights, im2col layout (bias dropped)
    # y_ref  : (1, Cout, HW)   f32  pre-BN conv1 output
    # st_ref : (1, Cout, 2)    f32  per-batch-element BN partial stats
    x1u = jnp.dot(x1_ref[0], kup_ref[...],
                  preferred_element_type=jnp.float32)        # (Cup, HW), f32
    xcat = jnp.concatenate([x2_ref[0], x1u], axis=0)          # (Cin, HW)
    patch = _im2col_rows(xcat, masks_ref[...], W)             # (9*Cin, HW)
    y = _conv_bf16(patch, w1_ref)                             # (Cout, HW)
    y_ref[0] = y
    st_ref[0] = _partial_stats(y)


def bn_relu_conv2_kernel(y1_ref, sc_ref, sh_ref, masks_ref, w2_ref,
                         y_ref, st_ref, *, W):
    # BN1+ReLU fused on the load path, then conv2 as one im2col matmul.
    a = jnp.maximum(y1_ref[0] * sc_ref[...] + sh_ref[...], 0.0)   # (C1, HW) f32
    patch = _im2col_rows(a, masks_ref[...], W)                    # (9*C1, HW)
    y = _conv_bf16(patch, w2_ref)                                 # (C2, HW)
    y_ref[0] = y
    st_ref[0] = _partial_stats(y)


def bn_relu_kernel(y_ref, sc_ref, sh_ref, o_ref):
    o_ref[0] = jnp.maximum(y_ref[0] * sc_ref[...] + sh_ref[...], 0.0)


# ------------------------------ kernel wrappers -------------------------------

def _pcall_conv1(x1_flat, x2_flat, kupT, masks, w1T, *, W_out):
    N, cup, hw1 = x1_flat.shape
    _, cskip, hw = x2_flat.shape
    cout, kdim = w1T.shape
    kern = functools.partial(up_cat_conv1_kernel, W=W_out)
    return pl.pallas_call(
        kern,
        out_shape=(jax.ShapeDtypeStruct((N, cout, hw), jnp.float32),
                   jax.ShapeDtypeStruct((N, cout, 2), jnp.float32)),
        grid=(N,),
        in_specs=[
            pl.BlockSpec((1, cup, hw1), lambda n: (n, 0, 0)),
            pl.BlockSpec((1, cskip, hw), lambda n: (n, 0, 0)),
            pl.BlockSpec((hw1, hw), lambda n: (0, 0)),
            pl.BlockSpec((9, hw), lambda n: (0, 0)),
            pl.BlockSpec((cout, kdim), lambda n: (0, 0)),
        ],
        out_specs=(pl.BlockSpec((1, cout, hw), lambda n: (n, 0, 0)),
                   pl.BlockSpec((1, cout, 2), lambda n: (n, 0, 0))),
        compiler_params=pltpu.CompilerParams(
            dimension_semantics=("parallel",)),
    )(x1_flat, x2_flat, kupT, masks, w1T)


def _pcall_conv2(y1, scale, shift, masks, w2T, *, W_out):
    N, c1, hw = y1.shape
    c2, kdim = w2T.shape
    kern = functools.partial(bn_relu_conv2_kernel, W=W_out)
    return pl.pallas_call(
        kern,
        out_shape=(jax.ShapeDtypeStruct((N, c2, hw), jnp.float32),
                   jax.ShapeDtypeStruct((N, c2, 2), jnp.float32)),
        grid=(N,),
        in_specs=[
            pl.BlockSpec((1, c1, hw), lambda n: (n, 0, 0)),
            pl.BlockSpec((c1, 1), lambda n: (0, 0)),
            pl.BlockSpec((c1, 1), lambda n: (0, 0)),
            pl.BlockSpec((9, hw), lambda n: (0, 0)),
            pl.BlockSpec((c2, kdim), lambda n: (0, 0)),
        ],
        out_specs=(pl.BlockSpec((1, c2, hw), lambda n: (n, 0, 0)),
                   pl.BlockSpec((1, c2, 2), lambda n: (n, 0, 0))),
        compiler_params=pltpu.CompilerParams(
            dimension_semantics=("parallel",)),
    )(y1, scale, shift, masks, w2T)


def _pcall_bn_relu(y, scale, shift):
    N, c, hw = y.shape
    return pl.pallas_call(
        bn_relu_kernel,
        out_shape=jax.ShapeDtypeStruct((N, c, hw), jnp.float32),
        grid=(N,),
        in_specs=[
            pl.BlockSpec((1, c, hw), lambda n: (n, 0, 0)),
            pl.BlockSpec((c, 1), lambda n: (0, 0)),
            pl.BlockSpec((c, 1), lambda n: (0, 0)),
        ],
        out_specs=pl.BlockSpec((1, c, hw), lambda n: (n, 0, 0)),
        compiler_params=pltpu.CompilerParams(
            dimension_semantics=("parallel",)),
    )(y, scale, shift)


def _bn_fold(stats, count, gamma, beta, eps=1e-5):
    """Combine (N, C, 2) partial [sum, sumsq] into BN scale/shift, shape (C,1)."""
    tot = jnp.sum(stats, axis=0)                    # (C, 2)
    mean = tot[:, 0] / count
    var = tot[:, 1] / count - mean * mean           # biased var (training BN)
    scale = gamma * jax.lax.rsqrt(var + eps)
    shift = beta - mean * scale
    return scale.reshape(-1, 1), shift.reshape(-1, 1)


# ------------------------------- up_conv forward ------------------------------

def up_conv_forward(params, x1_nchw, x2_nchw, eps=1e-5):
    N, cup, H1, W1 = x1_nchw.shape
    Ho, Wo = 2 * H1, 2 * W1
    HW = Ho * Wo

    # Bilinear upsample (align_corners=True) as one flattened-spatial operator.
    Mh = _interp_matrix(H1, Ho)
    Mw = _interp_matrix(W1, Wo)
    kupT = jnp.asarray(np.kron(Mh, Mw).T)           # (H1*W1, HW) f32

    # F.pad exactly as the PyTorch module (its diffX comes from dim 2 but is
    # applied to W, diffY from dim 3 applied to H; int(diff/2) on the high side).
    diffX = Ho - x2_nchw.shape[2]
    diffY = Wo - x2_nchw.shape[3]
    x2p = jnp.pad(x2_nchw, ((0, 0), (0, 0),
                            (diffY // 2, int(diffY / 2)),
                            (diffX // 2, int(diffX / 2))))
    cskip = x2p.shape[1]

    # Free reshapes to the (C, H*W) lane-dense layout.
    x1_flat = x1_nchw.reshape(N, cup, H1 * W1)
    x2_flat = x2p.reshape(N, cskip, HW)

    masks = jnp.asarray(_conv_masks(Ho, Wo))        # (9, HW)
    w1T = _im2col_weights(params['w1'])             # (Cout, 9*Cin) bf16
    w2T = _im2col_weights(params['w2'])             # (Cout, 9*Cout) bf16
    cout = w2T.shape[0]

    # Kernel A: upsample + concat + conv1 (+ BN1 partial stats). Conv biases are
    # intentionally dropped: training-mode BN cancels them exactly.
    y1, st1 = _pcall_conv1(x1_flat, x2_flat, kupT, masks, w1T, W_out=Wo)
    scale1, shift1 = _bn_fold(st1, N * HW, params['g1'], params['be1'], eps)

    # Kernel B: BN1+ReLU fused on load + conv2 (+ BN2 partial stats).
    y2, st2 = _pcall_conv2(y1, scale1, shift1, masks, w2T, W_out=Wo)
    scale2, shift2 = _bn_fold(st2, N * HW, params['g2'], params['be2'], eps)

    # Kernel C: BN2 + ReLU, lane-dense output; trailing reshape is free.
    out_flat = _pcall_bn_relu(y2, scale2, shift2)
    return out_flat.reshape(N, cout, Ho, Wo)


# ------------------------------ pure-JAX reference ----------------------------

def _ref_conv_bn_relu(x_nhwc, w, b, gamma, beta, eps=1e-5):
    y = jax.lax.conv_general_dilated(
        x_nhwc, w, window_strides=(1, 1), padding='SAME',
        dimension_numbers=('NHWC', 'HWIO', 'NHWC'))
    y = y + b.reshape(1, 1, 1, -1)
    mean = jnp.mean(y, axis=(0, 1, 2))
    var = jnp.var(y, axis=(0, 1, 2))
    y = (y - mean) / jnp.sqrt(var + eps) * gamma + beta
    return jnp.maximum(y, 0.0)


def _ref_forward(params, x1_nchw, x2_nchw):
    N, C1, H1, W1 = x1_nchw.shape
    Mh = jnp.asarray(_interp_matrix(H1, 2 * H1))
    Mw = jnp.asarray(_interp_matrix(W1, 2 * W1))
    x1u = jnp.einsum('oh,pw,nchw->ncop', Mh, Mw, x1_nchw)
    diffX = x1u.shape[2] - x2_nchw.shape[2]
    diffY = x1u.shape[3] - x2_nchw.shape[3]
    x2p = jnp.pad(x2_nchw, ((0, 0), (0, 0),
                            (diffY // 2, int(diffY / 2)),
                            (diffX // 2, int(diffX / 2))))
    xcat = jnp.concatenate([x2p, x1u], axis=1)
    x = jnp.transpose(xcat, (0, 2, 3, 1))
    x = _ref_conv_bn_relu(x, params['w1'], params['b1'], params['g1'], params['be1'])
    x = _ref_conv_bn_relu(x, params['w2'], params['b2'], params['g2'], params['be2'])
    return jnp.transpose(x, (0, 3, 1, 2))


# ------------------------------------ main ------------------------------------

if __name__ == "__main__":
    key = jax.random.PRNGKey(0)
    k = jax.random.split(key, 10)

    # x1 is the coarse feature map, x2 the skip connection.
    # up_conv(in_ch=8, out_ch=8): concat channels = 4 + 4 = 8.
    N, Cskip, H2, W2 = 2, 4, 16, 16
    Cup, H1, W1 = 4, 8, 8
    in_ch, out_ch = Cskip + Cup, 8

    x1 = jax.random.normal(k[0], (N, Cup, H1, W1), jnp.float32)
    x2 = jax.random.normal(k[1], (N, Cskip, H2, W2), jnp.float32)

    # Deterministic parameter init (conv weights in HWIO layout). Conv biases
    # are only consumed by the reference: training-mode BN cancels them.
    params = {
        'w1': 0.1 * jax.random.normal(k[2], (3, 3, in_ch, out_ch), jnp.float32),
        'b1': 0.1 * jax.random.normal(k[3], (out_ch,), jnp.float32),
        'g1': 1.0 + 0.1 * jax.random.normal(k[4], (out_ch,), jnp.float32),
        'be1': 0.1 * jax.random.normal(k[5], (out_ch,), jnp.float32),
        'w2': 0.1 * jax.random.normal(k[6], (3, 3, out_ch, out_ch), jnp.float32),
        'b2': 0.1 * jax.random.normal(k[7], (out_ch,), jnp.float32),
        'g2': 1.0 + 0.1 * jax.random.normal(k[8], (out_ch,), jnp.float32),
        'be2': 0.1 * jax.random.normal(k[9], (out_ch,), jnp.float32),
    }

    out = jax.jit(up_conv_forward)(params, x1, x2)
    out = jax.block_until_ready(out)
    assert out.shape == (N, out_ch, H2, W2), out.shape

    ref = jax.block_until_ready(jax.jit(_ref_forward)(params, x1, x2))
    np.testing.assert_allclose(np.asarray(out), np.asarray(ref),
                               rtol=5e-2, atol=5e-2)

    print("KERNEL_OK")
</pallas_src>

<mosaic_0001>
module attributes {stable_mosaic.version = 11 : i64} {
  func.func @up_cat_conv1_kernel(%arg0: i32, %arg1: memref<1x4x64xf32, #tpu.memory_space<vmem>>, %arg2: memref<1x4x256xf32, #tpu.memory_space<vmem>>, %arg3: memref<64x256xf32, #tpu.memory_space<vmem>>, %arg4: memref<9x256xf32, #tpu.memory_space<vmem>>, %arg5: memref<8x72xbf16, #tpu.memory_space<vmem>>, %arg6: memref<1x8x256xf32, #tpu.memory_space<vmem>>, %arg7: memref<1x8x2xf32, #tpu.memory_space<vmem>>) attributes {dimension_semantics = [#tpu.dimension_semantics<parallel>], iteration_bounds = array<i64: 2>, scalar_prefetch = 0 : i64, scratch_operands = 0 : i64, tpu.core_type = #tpu.core_type<tc>, window_params = [{transform_indices = @transform_0, window_bounds = array<i64: 1, 4, 64>}, {transform_indices = @transform_1, window_bounds = array<i64: 1, 4, 256>}, {pipeline_mode = #tpu.pipeline_mode<synchronous>, transform_indices = @transform_2, window_bounds = array<i64: 64, 256>}, {pipeline_mode = #tpu.pipeline_mode<synchronous>, transform_indices = @transform_3, window_bounds = array<i64: 9, 256>}, {pipeline_mode = #tpu.pipeline_mode<synchronous>, transform_indices = @transform_4, window_bounds = array<i64: 8, 72>}, {transform_indices = @transform_5, window_bounds = array<i64: 1, 8, 256>}, {transform_indices = @transform_6, window_bounds = array<i64: 1, 8, 2>}]} {
    %c0 = arith.constant 0 : index
    %c0_0 = arith.constant 0 : index
    %c0_1 = arith.constant 0 : index
    %0 = vector.load %arg1[%c0, %c0_0, %c0_1] : memref<1x4x64xf32, #tpu.memory_space<vmem>>, vector<1x4x64xf32>
    %1 = vector.shape_cast %0 : vector<1x4x64xf32> to vector<4x64xf32>
    %c0_2 = arith.constant 0 : index
    %c0_3 = arith.constant 0 : index
    %2 = vector.load %arg3[%c0_2, %c0_3] : memref<64x256xf32, #tpu.memory_space<vmem>>, vector<64x256xf32>
    %cst = arith.constant dense<0.000000e+00> : vector<4x256xf32>
    %3 = tpu.matmul %1, %2, %cst {dimension_numbers = #tpu.dot_dimension_numbers<[1], [0], [0], [1], [0, 0, 1, 1], [], []>} : vector<4x64xf32>, vector<64x256xf32>, vector<4x256xf32> -> vector<4x256xf32>
    %c0_4 = arith.constant 0 : index
    %c0_5 = arith.constant 0 : index
    %c0_6 = arith.constant 0 : index
    %4 = vector.load %arg2[%c0_4, %c0_5, %c0_6] : memref<1x4x256xf32, #tpu.memory_space<vmem>>, vector<1x4x256xf32>
    %5 = vector.shape_cast %4 : vector<1x4x256xf32> to vector<4x256xf32>
    %6 = tpu.concatenate %5, %3 in 0 : vector<4x256xf32>, vector<4x256xf32> -> vector<8x256xf32>
    %c0_7 = arith.constant 0 : index
    %c0_8 = arith.constant 0 : index
    %7 = vector.load %arg4[%c0_7, %c0_8] : memref<9x256xf32, #tpu.memory_space<vmem>>, vector<9x256xf32>
    %8 = vector.extract_strided_slice %6 {offsets = [0, 239], sizes = [8, 17], strides = [1, 1]} : vector<8x256xf32> to vector<8x17xf32>
    %9 = vector.extract_strided_slice %6 {offsets = [0, 0], sizes = [8, 239], strides = [1, 1]} : vector<8x256xf32> to vector<8x239xf32>
    %10 = tpu.concatenate %8, %9 in 1 : vector<8x17xf32>, vector<8x239xf32> -> vector<8x256xf32>
    %11 = vector.extract_strided_slice %7 {offsets = [0, 0], sizes = [1, 256], strides = [1, 1]} : vector<9x256xf32> to vector<1x256xf32>
    %12 = vector.broadcast %11 : vector<1x256xf32> to vector<8x256xf32>
    %13 = arith.mulf %10, %12 : vector<8x256xf32>
    %14 = vector.extract_strided_slice %6 {offsets = [0, 240], sizes = [8, 16], strides = [1, 1]} : vector<8x256xf32> to vector<8x16xf32>
    %15 = vector.extract_strided_slice %6 {offsets = [0, 0], sizes = [8, 240], strides = [1, 1]} : vector<8x256xf32> to vector<8x240xf32>
    %16 = tpu.concatenate %14, %15 in 1 : vector<8x16xf32>, vector<8x240xf32> -> vector<8x256xf32>
    %17 = vector.extract_strided_slice %7 {offsets = [1, 0], sizes = [1, 256], strides = [1, 1]} : vector<9x256xf32> to vector<1x256xf32>
    %18 = vector.broadcast %17 : vector<1x256xf32> to vector<8x256xf32>
    %19 = arith.mulf %16, %18 : vector<8x256xf32>
    %20 = vector.extract_strided_slice %6 {offsets = [0, 241], sizes = [8, 15], strides = [1, 1]} : vector<8x256xf32> to vector<8x15xf32>
    %21 = vector.extract_strided_slice %6 {offsets = [0, 0], sizes = [8, 241], strides = [1, 1]} : vector<8x256xf32> to vector<8x241xf32>
    %22 = tpu.concatenate %20, %21 in 1 : vector<8x15xf32>, vector<8x241xf32> -> vector<8x256xf32>
    %23 = vector.extract_strided_slice %7 {offsets = [2, 0], sizes = [1, 256], strides = [1, 1]} : vector<9x256xf32> to vector<1x256xf32>
    %24 = vector.broadcast %23 : vector<1x256xf32> to vector<8x256xf32>
    %25 = arith.mulf %22, %24 : vector<8x256xf32>
    %26 = vector.extract_strided_slice %6 {offsets = [0, 255], sizes = [8, 1], strides = [1, 1]} : vector<8x256xf32> to vector<8x1xf32>
    %27 = vector.extract_strided_slice %6 {offsets = [0, 0], sizes = [8, 255], strides = [1, 1]} : vector<8x256xf32> to vector<8x255xf32>
    %28 = tpu.concatenate %26, %27 in 1 : vector<8x1xf32>, vector<8x255xf32> -> vector<8x256xf32>
    %29 = vector.extract_strided_slice %7 {offsets = [3, 0], sizes = [1, 256], strides = [1, 1]} : vector<9x256xf32> to vector<1x256xf32>
    %30 = vector.broadcast %29 : vector<1x256xf32> to vector<8x256xf32>
    %31 = arith.mulf %28, %30 : vector<8x256xf32>
    %32 = vector.extract_strided_slice %7 {offsets = [4, 0], sizes = [1, 256], strides = [1, 1]} : vector<9x256xf32> to vector<1x256xf32>
    %33 = vector.broadcast %32 : vector<1x256xf32> to vector<8x256xf32>
    %34 = arith.mulf %6, %33 : vector<8x256xf32>
    %35 = vector.extract_strided_slice %6 {offsets = [0, 1], sizes = [8, 255], strides = [1, 1]} : vector<8x256xf32> to vector<8x255xf32>
    %36 = vector.extract_strided_slice %6 {offsets = [0, 0], sizes = [8, 1], strides = [1, 1]} : vector<8x256xf32> to vector<8x1xf32>
    %37 = tpu.concatenate %35, %36 in 1 : vector<8x255xf32>, vector<8x1xf32> -> vector<8x256xf32>
    %38 = vector.extract_strided_slice %7 {offsets = [5, 0], sizes = [1, 256], strides = [1, 1]} : vector<9x256xf32> to vector<1x256xf32>
    %39 = vector.broadcast %38 : vector<1x256xf32> to vector<8x256xf32>
    %40 = arith.mulf %37, %39 : vector<8x256xf32>
    %41 = vector.extract_strided_slice %6 {offsets = [0, 15], sizes = [8, 241], strides = [1, 1]} : vector<8x256xf32> to vector<8x241xf32>
    %42 = vector.extract_strided_slice %6 {offsets = [0, 0], sizes = [8, 15], strides = [1, 1]} : vector<8x256xf32> to vector<8x15xf32>
    %43 = tpu.concatenate %41, %42 in 1 : vector<8x241xf32>, vector<8x15xf32> -> vector<8x256xf32>
    %44 = vector.extract_strided_slice %7 {offsets = [6, 0], sizes = [1, 256], strides = [1, 1]} : vector<9x256xf32> to vector<1x256xf32>
    %45 = vector.broadcast %44 : vector<1x256xf32> to vector<8x256xf32>
    %46 = arith.mulf %43, %45 : vector<8x256xf32>
    %47 = vector.extract_strided_slice %6 {offsets = [0, 16], sizes = [8, 240], strides = [1, 1]} : vector<8x256xf32> to vector<8x240xf32>
    %48 = vector.extract_strided_slice %6 {offsets = [0, 0], sizes = [8, 16], strides = [1, 1]} : vector<8x256xf32> to vector<8x16xf32>
    %49 = tpu.concatenate %47, %48 in 1 : vector<8x240xf32>, vector<8x16xf32> -> vector<8x256xf32>
    %50 = vector.extract_strided_slice %7 {offsets = [7, 0], sizes = [1, 256], strides = [1, 1]} : vector<9x256xf32> to vector<1x256xf32>
    %51 = vector.broadcast %50 : vector<1x256xf32> to vector<8x256xf32>
    %52 = arith.mulf %49, %51 : vector<8x256xf32>
    %53 = vector.extract_strided_slice %6 {offsets = [0, 17], sizes = [8, 239], strides = [1, 1]} : vector<8x256xf32> to vector<8x239xf32>
    %54 = vector.extract_strided_slice %6 {offsets = [0, 0], sizes = [8, 17], strides = [1, 1]} : vector<8x256xf32> to vector<8x17xf32>
    %55 = tpu.concatenate %53, %54 in 1 : vector<8x239xf32>, vector<8x17xf32> -> vector<8x256xf32>
    %56 = vector.extract_strided_slice %7 {offsets = [8, 0], sizes = [1, 256], strides = [1, 1]} : vector<9x256xf32> to vector<1x256xf32>
    %57 = vector.broadcast %56 : vector<1x256xf32> to vector<8x256xf32>
    %58 = arith.mulf %55, %57 : vector<8x256xf32>
    %59 = tpu.concatenate %13, %19, %25, %31, %34, %40, %46, %52, %58 in 0 : vector<8x256xf32>, vector<8x256xf32>, vector<8x256xf32>, vector<8x256xf32>, vector<8x256xf32>, vector<8x256xf32>, vector<8x256xf32>, vector<8x256xf32>, vector<8x256xf32> -> vector<72x256xf32>
    %c0_9 = arith.constant 0 : index
    %c0_10 = arith.constant 0 : index
    %60 = vector.load %arg5[%c0_9, %c0_10] : memref<8x72xbf16, #tpu.memory_space<vmem>>, vector<8x72xbf16>
    %61 = arith.truncf %59 : vector<72x256xf32> to vector<72x256xbf16>
    %cst_11 = arith.constant dense<0.000000e+00> : vector<8x256xf32>
    %62 = tpu.matmul %60, %61, %cst_11 {dimension_numbers = #tpu.dot_dimension_numbers<[1], [0], [0], [1], [0, 0, 1, 1], [], []>} : vector<8x72xbf16>, vector<72x256xbf16>, vector<8x256xf32> -> vector<8x256xf32>
    %c0_12 = arith.constant 0 : index
    %c0_13 = arith.constant 0 : index
    %c0_14 = arith.constant 0 : index
    %63 = vector.load %arg6[%c0_12, %c0_13, %c0_14] : memref<1x8x256xf32, #tpu.memory_space<vmem>>, vector<1x8x256xf32>
    %64 = vector.shape_cast %63 : vector<1x8x256xf32> to vector<8x256xf32>
    %65 = vector.shape_cast %62 : vector<8x256xf32> to vector<1x8x256xf32>
    tpu.vector_store %arg6[%c0_12, %c0_13, %c0_14], %65 {strides = array<i32>} : memref<1x8x256xf32, #tpu.memory_space<vmem>>, vector<1x8x256xf32>,
    %cst_15 = arith.constant dense<0.000000e+00> : vector<8xf32>
    %66 = vector.multi_reduction <add>, %62, %cst_15 [1] : vector<8x256xf32> to vector<8xf32>
    %67 = vector.shape_cast %66 : vector<8xf32> to vector<8x1xf32>
    %68 = arith.mulf %62, %62 : vector<8x256xf32>
    %cst_16 = arith.constant dense<0.000000e+00> : vector<8xf32>
    %69 = vector.multi_reduction <add>, %68, %cst_16 [1] : vector<8x256xf32> to vector<8xf32>
    %70 = vector.shape_cast %69 : vector<8xf32> to vector<8x1xf32>
    %71 = tpu.concatenate %67, %70 in 1 : vector<8x1xf32>, vector<8x1xf32> -> vector<8x2xf32>
    %c0_17 = arith.constant 0 : index
    %c0_18 = arith.constant 0 : index
    %c0_19 = arith.constant 0 : index
    %72 = vector.load %arg7[%c0_17, %c0_18, %c0_19] : memref<1x8x2xf32, #tpu.memory_space<vmem>>, vector<1x8x2xf32>
    %73 = vector.shape_cast %72 : vector<1x8x2xf32> to vector<8x2xf32>
    %74 = vector.shape_cast %71 : vector<8x2xf32> to vector<1x8x2xf32>
    tpu.vector_store %arg7[%c0_17, %c0_18, %c0_19], %74 {strides = array<i32>} : memref<1x8x2xf32, #tpu.memory_space<vmem>>, vector<1x8x2xf32>,
    return
  }
  func.func @transform_0(%arg0: i32) -> (i32, i32, i32) {
    %c0_i32 = arith.constant 0 : i32
    %c0_i32_0 = arith.constant 0 : i32
    %c0_i32_1 = arith.constant 0 : i32
    return %arg0, %c0_i32, %c0_i32_0 : i32, i32, i32
  }
  func.func @transform_1(%arg0: i32) -> (i32, i32, i32) {
    %c0_i32 = arith.constant 0 : i32
    %c0_i32_0 = arith.constant 0 : i32
    %c0_i32_1 = arith.constant 0 : i32
    return %arg0, %c0_i32, %c0_i32_0 : i32, i32, i32
  }
  func.func @transform_2(%arg0: i32) -> (i32, i32) {
    %c0_i32 = arith.constant 0 : i32
    %c0_i32_0 = arith.constant 0 : i32
    %c0_i32_1 = arith.constant 0 : i32
    return %c0_i32, %c0_i32_0 : i32, i32
  }
  func.func @transform_3(%arg0: i32) -> (i32, i32) {
    %c0_i32 = arith.constant 0 : i32
    %c0_i32_0 = arith.constant 0 : i32
    %c0_i32_1 = arith.constant 0 : i32
    return %c0_i32, %c0_i32_0 : i32, i32
  }
  func.func @transform_4(%arg0: i32) -> (i32, i32) {
    %c0_i32 = arith.constant 0 : i32
    %c0_i32_0 = arith.constant 0 : i32
    %c0_i32_1 = arith.constant 0 : i32
    return %c0_i32, %c0_i32_0 : i32, i32
  }
  func.func @transform_5(%arg0: i32) -> (i32, i32, i32) {
    %c0_i32 = arith.constant 0 : i32
    %c0_i32_0 = arith.constant 0 : i32
    %c0_i32_1 = arith.constant 0 : i32
    return %arg0, %c0_i32, %c0_i32_0 : i32, i32, i32
  }
  func.func @transform_6(%arg0: i32) -> (i32, i32, i32) {
    %c0_i32 = arith.constant 0 : i32
    %c0_i32_0 = arith.constant 0 : i32
    %c0_i32_1 = arith.constant 0 : i32
    return %arg0, %c0_i32, %c0_i32_0 : i32, i32, i32
  }
}

module attributes {stable_mosaic.version = 11 : i64} {
  func.func @bn_relu_kernel(%arg0: i32, %arg1: memref<1x8x256xf32, #tpu.memory_space<vmem>>, %arg2: memref<8x1xf32, #tpu.memory_space<vmem>>, %arg3: memref<8x1xf32, #tpu.memory_space<vmem>>, %arg4: memref<1x8x256xf32, #tpu.memory_space<vmem>>) attributes {dimension_semantics = [#tpu.dimension_semantics<parallel>], iteration_bounds = array<i64: 2>, scalar_prefetch = 0 : i64, scratch_operands = 0 : i64, tpu.core_type = #tpu.core_type<tc>, window_params = [{transform_indices = @transform_0, window_bounds = array<i64: 1, 8, 256>}, {pipeline_mode = #tpu.pipeline_mode<synchronous>, transform_indices = @transform_1, window_bounds = array<i64: 8, 1>}, {pipeline_mode = #tpu.pipeline_mode<synchronous>, transform_indices = @transform_2, window_bounds = array<i64: 8, 1>}, {transform_indices = @transform_3, window_bounds = array<i64: 1, 8, 256>}]} {
    %c0 = arith.constant 0 : index
    %c0_0 = arith.constant 0 : index
    %c0_1 = arith.constant 0 : index
    %0 = vector.load %arg1[%c0, %c0_0, %c0_1] : memref<1x8x256xf32, #tpu.memory_space<vmem>>, vector<1x8x256xf32>
    %1 = vector.shape_cast %0 : vector<1x8x256xf32> to vector<8x256xf32>
    %c0_2 = arith.constant 0 : index
    %c0_3 = arith.constant 0 : index
    %2 = vector.load %arg2[%c0_2, %c0_3] : memref<8x1xf32, #tpu.memory_space<vmem>>, vector<8x1xf32>
    %3 = vector.broadcast %2 : vector<8x1xf32> to vector<8x256xf32>
    %4 = arith.mulf %1, %3 : vector<8x256xf32>
    %c0_4 = arith.constant 0 : index
    %c0_5 = arith.constant 0 : index
    %5 = vector.load %arg3[%c0_4, %c0_5] : memref<8x1xf32, #tpu.memory_space<vmem>>, vector<8x1xf32>
    %6 = vector.broadcast %5 : vector<8x1xf32> to vector<8x256xf32>
    %7 = arith.addf %4, %6 : vector<8x256xf32>
    %cst = arith.constant 0.000000e+00 : f32
    %8 = vector.broadcast %cst : f32 to vector<8x256xf32>
    %9 = arith.maximumf %7, %8 : vector<8x256xf32>
    %c0_6 = arith.constant 0 : index
    %c0_7 = arith.constant 0 : index
    %c0_8 = arith.constant 0 : index
    %10 = vector.load %arg4[%c0_6, %c0_7, %c0_8] : memref<1x8x256xf32, #tpu.memory_space<vmem>>, vector<1x8x256xf32>
    %11 = vector.shape_cast %10 : vector<1x8x256xf32> to vector<8x256xf32>
    %12 = vector.shape_cast %9 : vector<8x256xf32> to vector<1x8x256xf32>
    tpu.vector_store %arg4[%c0_6, %c0_7, %c0_8], %12 {strides = array<i32>} : memref<1x8x256xf32, #tpu.memory_space<vmem>>, vector<1x8x256xf32>,
    return
  }
  func.func @transform_0(%arg0: i32) -> (i32, i32, i32) {
    %c0_i32 = arith.constant 0 : i32
    %c0_i32_0 = arith.constant 0 : i32
    %c0_i32_1 = arith.constant 0 : i32
    return %arg0, %c0_i32, %c0_i32_0 : i32, i32, i32
  }
  func.func @transform_1(%arg0: i32) -> (i32, i32) {
    %c0_i32 = arith.constant 0 : i32
    %c0_i32_0 = arith.constant 0 : i32
    %c0_i32_1 = arith.constant 0 : i32
    return %c0_i32, %c0_i32_0 : i32, i32
  }
  func.func @transform_2(%arg0: i32) -> (i32, i32) {
    %c0_i32 = arith.constant 0 : i32
    %c0_i32_0 = arith.constant 0 : i32
    %c0_i32_1 = arith.constant 0 : i32
    return %c0_i32, %c0_i32_0 : i32, i32
  }
  func.func @transform_3(%arg0: i32) -> (i32, i32, i32) {
    %c0_i32 = arith.constant 0 : i32
    %c0_i32_0 = arith.constant 0 : i32
    %c0_i32_1 = arith.constant 0 : i32
    return %arg0, %c0_i32, %c0_i32_0 : i32, i32, i32
  }
}

module attributes {stable_mosaic.version = 11 : i64} {
  func.func @bn_relu_conv2_kernel(%arg0: i32, %arg1: memref<1x8x256xf32, #tpu.memory_space<vmem>>, %arg2: memref<8x1xf32, #tpu.memory_space<vmem>>, %arg3: memref<8x1xf32, #tpu.memory_space<vmem>>, %arg4: memref<9x256xf32, #tpu.memory_space<vmem>>, %arg5: memref<8x72xbf16, #tpu.memory_space<vmem>>, %arg6: memref<1x8x256xf32, #tpu.memory_space<vmem>>, %arg7: memref<1x8x2xf32, #tpu.memory_space<vmem>>) attributes {dimension_semantics = [#tpu.dimension_semantics<parallel>], iteration_bounds = array<i64: 2>, scalar_prefetch = 0 : i64, scratch_operands = 0 : i64, tpu.core_type = #tpu.core_type<tc>, window_params = [{transform_indices = @transform_0, window_bounds = array<i64: 1, 8, 256>}, {pipeline_mode = #tpu.pipeline_mode<synchronous>, transform_indices = @transform_1, window_bounds = array<i64: 8, 1>}, {pipeline_mode = #tpu.pipeline_mode<synchronous>, transform_indices = @transform_2, window_bounds = array<i64: 8, 1>}, {pipeline_mode = #tpu.pipeline_mode<synchronous>, transform_indices = @transform_3, window_bounds = array<i64: 9, 256>}, {pipeline_mode = #tpu.pipeline_mode<synchronous>, transform_indices = @transform_4, window_bounds = array<i64: 8, 72>}, {transform_indices = @transform_5, window_bounds = array<i64: 1, 8, 256>}, {transform_indices = @transform_6, window_bounds = array<i64: 1, 8, 2>}]} {
    %c0 = arith.constant 0 : index
    %c0_0 = arith.constant 0 : index
    %c0_1 = arith.constant 0 : index
    %0 = vector.load %arg1[%c0, %c0_0, %c0_1] : memref<1x8x256xf32, #tpu.memory_space<vmem>>, vector<1x8x256xf32>
    %1 = vector.shape_cast %0 : vector<1x8x256xf32> to vector<8x256xf32>
    %c0_2 = arith.constant 0 : index
    %c0_3 = arith.constant 0 : index
    %2 = vector.load %arg2[%c0_2, %c0_3] : memref<8x1xf32, #tpu.memory_space<vmem>>, vector<8x1xf32>
    %3 = vector.broadcast %2 : vector<8x1xf32> to vector<8x256xf32>
    %4 = arith.mulf %1, %3 : vector<8x256xf32>
    %c0_4 = arith.constant 0 : index
    %c0_5 = arith.constant 0 : index
    %5 = vector.load %arg3[%c0_4, %c0_5] : memref<8x1xf32, #tpu.memory_space<vmem>>, vector<8x1xf32>
    %6 = vector.broadcast %5 : vector<8x1xf32> to vector<8x256xf32>
    %7 = arith.addf %4, %6 : vector<8x256xf32>
    %cst = arith.constant 0.000000e+00 : f32
    %8 = vector.broadcast %cst : f32 to vector<8x256xf32>
    %9 = arith.maximumf %7, %8 : vector<8x256xf32>
    %c0_6 = arith.constant 0 : index
    %c0_7 = arith.constant 0 : index
    %10 = vector.load %arg4[%c0_6, %c0_7] : memref<9x256xf32, #tpu.memory_space<vmem>>, vector<9x256xf32>
    %11 = vector.extract_strided_slice %9 {offsets = [0, 239], sizes = [8, 17], strides = [1, 1]} : vector<8x256xf32> to vector<8x17xf32>
    %12 = vector.extract_strided_slice %9 {offsets = [0, 0], sizes = [8, 239], strides = [1, 1]} : vector<8x256xf32> to vector<8x239xf32>
    %13 = tpu.concatenate %11, %12 in 1 : vector<8x17xf32>, vector<8x239xf32> -> vector<8x256xf32>
    %14 = vector.extract_strided_slice %10 {offsets = [0, 0], sizes = [1, 256], strides = [1, 1]} : vector<9x256xf32> to vector<1x256xf32>
    %15 = vector.broadcast %14 : vector<1x256xf32> to vector<8x256xf32>
    %16 = arith.mulf %13, %15 : vector<8x256xf32>
    %17 = vector.extract_strided_slice %9 {offsets = [0, 240], sizes = [8, 16], strides = [1, 1]} : vector<8x256xf32> to vector<8x16xf32>
    %18 = vector.extract_strided_slice %9 {offsets = [0, 0], sizes = [8, 240], strides = [1, 1]} : vector<8x256xf32> to vector<8x240xf32>
    %19 = tpu.concatenate %17, %18 in 1 : vector<8x16xf32>, vector<8x240xf32> -> vector<8x256xf32>
    %20 = vector.extract_strided_slice %10 {offsets = [1, 0], sizes = [1, 256], strides = [1, 1]} : vector<9x256xf32> to vector<1x256xf32>
    %21 = vector.broadcast %20 : vector<1x256xf32> to vector<8x256xf32>
    %22 = arith.mulf %19, %21 : vector<8x256xf32>
    %23 = vector.extract_strided_slice %9 {offsets = [0, 241], sizes = [8, 15], strides = [1, 1]} : vector<8x256xf32> to vector<8x15xf32>
    %24 = vector.extract_strided_slice %9 {offsets = [0, 0], sizes = [8, 241], strides = [1, 1]} : vector<8x256xf32> to vector<8x241xf32>
    %25 = tpu.concatenate %23, %24 in 1 : vector<8x15xf32>, vector<8x241xf32> -> vector<8x256xf32>
    %26 = vector.extract_strided_slice %10 {offsets = [2, 0], sizes = [1, 256], strides = [1, 1]} : vector<9x256xf32> to vector<1x256xf32>
    %27 = vector.broadcast %26 : vector<1x256xf32> to vector<8x256xf32>
    %28 = arith.mulf %25, %27 : vector<8x256xf32>
    %29 = vector.extract_strided_slice %9 {offsets = [0, 255], sizes = [8, 1], strides = [1, 1]} : vector<8x256xf32> to vector<8x1xf32>
    %30 = vector.extract_strided_slice %9 {offsets = [0, 0], sizes = [8, 255], strides = [1, 1]} : vector<8x256xf32> to vector<8x255xf32>
    %31 = tpu.concatenate %29, %30 in 1 : vector<8x1xf32>, vector<8x255xf32> -> vector<8x256xf32>
    %32 = vector.extract_strided_slice %10 {offsets = [3, 0], sizes = [1, 256], strides = [1, 1]} : vector<9x256xf32> to vector<1x256xf32>
    %33 = vector.broadcast %32 : vector<1x256xf32> to vector<8x256xf32>
    %34 = arith.mulf %31, %33 : vector<8x256xf32>
    %35 = vector.extract_strided_slice %10 {offsets = [4, 0], sizes = [1, 256], strides = [1, 1]} : vector<9x256xf32> to vector<1x256xf32>
    %36 = vector.broadcast %35 : vector<1x256xf32> to vector<8x256xf32>
    %37 = arith.mulf %9, %36 : vector<8x256xf32>
    %38 = vector.extract_strided_slice %9 {offsets = [0, 1], sizes = [8, 255], strides = [1, 1]} : vector<8x256xf32> to vector<8x255xf32>
    %39 = vector.extract_strided_slice %9 {offsets = [0, 0], sizes = [8, 1], strides = [1, 1]} : vector<8x256xf32> to vector<8x1xf32>
    %40 = tpu.concatenate %38, %39 in 1 : vector<8x255xf32>, vector<8x1xf32> -> vector<8x256xf32>
    %41 = vector.extract_strided_slice %10 {offsets = [5, 0], sizes = [1, 256], strides = [1, 1]} : vector<9x256xf32> to vector<1x256xf32>
    %42 = vector.broadcast %41 : vector<1x256xf32> to vector<8x256xf32>
    %43 = arith.mulf %40, %42 : vector<8x256xf32>
    %44 = vector.extract_strided_slice %9 {offsets = [0, 15], sizes = [8, 241], strides = [1, 1]} : vector<8x256xf32> to vector<8x241xf32>
    %45 = vector.extract_strided_slice %9 {offsets = [0, 0], sizes = [8, 15], strides = [1, 1]} : vector<8x256xf32> to vector<8x15xf32>
    %46 = tpu.concatenate %44, %45 in 1 : vector<8x241xf32>, vector<8x15xf32> -> vector<8x256xf32>
    %47 = vector.extract_strided_slice %10 {offsets = [6, 0], sizes = [1, 256], strides = [1, 1]} : vector<9x256xf32> to vector<1x256xf32>
    %48 = vector.broadcast %47 : vector<1x256xf32> to vector<8x256xf32>
    %49 = arith.mulf %46, %48 : vector<8x256xf32>
    %50 = vector.extract_strided_slice %9 {offsets = [0, 16], sizes = [8, 240], strides = [1, 1]} : vector<8x256xf32> to vector<8x240xf32>
    %51 = vector.extract_strided_slice %9 {offsets = [0, 0], sizes = [8, 16], strides = [1, 1]} : vector<8x256xf32> to vector<8x16xf32>
    %52 = tpu.concatenate %50, %51 in 1 : vector<8x240xf32>, vector<8x16xf32> -> vector<8x256xf32>
    %53 = vector.extract_strided_slice %10 {offsets = [7, 0], sizes = [1, 256], strides = [1, 1]} : vector<9x256xf32> to vector<1x256xf32>
    %54 = vector.broadcast %53 : vector<1x256xf32> to vector<8x256xf32>
    %55 = arith.mulf %52, %54 : vector<8x256xf32>
    %56 = vector.extract_strided_slice %9 {offsets = [0, 17], sizes = [8, 239], strides = [1, 1]} : vector<8x256xf32> to vector<8x239xf32>
    %57 = vector.extract_strided_slice %9 {offsets = [0, 0], sizes = [8, 17], strides = [1, 1]} : vector<8x256xf32> to vector<8x17xf32>
    %58 = tpu.concatenate %56, %57 in 1 : vector<8x239xf32>, vector<8x17xf32> -> vector<8x256xf32>
    %59 = vector.extract_strided_slice %10 {offsets = [8, 0], sizes = [1, 256], strides = [1, 1]} : vector<9x256xf32> to vector<1x256xf32>
    %60 = vector.broadcast %59 : vector<1x256xf32> to vector<8x256xf32>
    %61 = arith.mulf %58, %60 : vector<8x256xf32>
    %62 = tpu.concatenate %16, %22, %28, %34, %37, %43, %49, %55, %61 in 0 : vector<8x256xf32>, vector<8x256xf32>, vector<8x256xf32>, vector<8x256xf32>, vector<8x256xf32>, vector<8x256xf32>, vector<8x256xf32>, vector<8x256xf32>, vector<8x256xf32> -> vector<72x256xf32>
    %c0_8 = arith.constant 0 : index
    %c0_9 = arith.constant 0 : index
    %63 = vector.load %arg5[%c0_8, %c0_9] : memref<8x72xbf16, #tpu.memory_space<vmem>>, vector<8x72xbf16>
    %64 = arith.truncf %62 : vector<72x256xf32> to vector<72x256xbf16>
    %cst_10 = arith.constant dense<0.000000e+00> : vector<8x256xf32>
    %65 = tpu.matmul %63, %64, %cst_10 {dimension_numbers = #tpu.dot_dimension_numbers<[1], [0], [0], [1], [0, 0, 1, 1], [], []>} : vector<8x72xbf16>, vector<72x256xbf16>, vector<8x256xf32> -> vector<8x256xf32>
    %c0_11 = arith.constant 0 : index
    %c0_12 = arith.constant 0 : index
    %c0_13 = arith.constant 0 : index
    %66 = vector.load %arg6[%c0_11, %c0_12, %c0_13] : memref<1x8x256xf32, #tpu.memory_space<vmem>>, vector<1x8x256xf32>
    %67 = vector.shape_cast %66 : vector<1x8x256xf32> to vector<8x256xf32>
    %68 = vector.shape_cast %65 : vector<8x256xf32> to vector<1x8x256xf32>
    tpu.vector_store %arg6[%c0_11, %c0_12, %c0_13], %68 {strides = array<i32>} : memref<1x8x256xf32, #tpu.memory_space<vmem>>, vector<1x8x256xf32>,
    %cst_14 = arith.constant dense<0.000000e+00> : vector<8xf32>
    %69 = vector.multi_reduction <add>, %65, %cst_14 [1] : vector<8x256xf32> to vector<8xf32>
    %70 = vector.shape_cast %69 : vector<8xf32> to vector<8x1xf32>
    %71 = arith.mulf %65, %65 : vector<8x256xf32>
    %cst_15 = arith.constant dense<0.000000e+00> : vector<8xf32>
    %72 = vector.multi_reduction <add>, %71, %cst_15 [1] : vector<8x256xf32> to vector<8xf32>
    %73 = vector.shape_cast %72 : vector<8xf32> to vector<8x1xf32>
    %74 = tpu.concatenate %70, %73 in 1 : vector<8x1xf32>, vector<8x1xf32> -> vector<8x2xf32>
    %c0_16 = arith.constant 0 : index
    %c0_17 = arith.constant 0 : index
    %c0_18 = arith.constant 0 : index
    %75 = vector.load %arg7[%c0_16, %c0_17, %c0_18] : memref<1x8x2xf32, #tpu.memory_space<vmem>>, vector<1x8x2xf32>
    %76 = vector.shape_cast %75 : vector<1x8x2xf32> to vector<8x2xf32>
    %77 = vector.shape_cast %74 : vector<8x2xf32> to vector<1x8x2xf32>
    tpu.vector_store %arg7[%c0_16, %c0_17, %c0_18], %77 {strides = array<i32>} : memref<1x8x2xf32, #tpu.memory_space<vmem>>, vector<1x8x2xf32>,
    return
  }
  func.func @transform_0(%arg0: i32) -> (i32, i32, i32) {
    %c0_i32 = arith.constant 0 : i32
    %c0_i32_0 = arith.constant 0 : i32
    %c0_i32_1 = arith.constant 0 : i32
    return %arg0, %c0_i32, %c0_i32_0 : i32, i32, i32
  }
  func.func @transform_1(%arg0: i32) -> (i32, i32) {
    %c0_i32 = arith.constant 0 : i32
    %c0_i32_0 = arith.constant 0 : i32
    %c0_i32_1 = arith.constant 0 : i32
    return %c0_i32, %c0_i32_0 : i32, i32
  }
  func.func @transform_2(%arg0: i32) -> (i32, i32) {
    %c0_i32 = arith.constant 0 : i32
    %c0_i32_0 = arith.constant 0 : i32
    %c0_i32_1 = arith.constant 0 : i32
    return %c0_i32, %c0_i32_0 : i32, i32
  }
  func.func @transform_3(%arg0: i32) -> (i32, i32) {
    %c0_i32 = arith.constant 0 : i32
    %c0_i32_0 = arith.constant 0 : i32
    %c0_i32_1 = arith.constant 0 : i32
    return %c0_i32, %c0_i32_0 : i32, i32
  }
  func.func @transform_4(%arg0: i32) -> (i32, i32) {
    %c0_i32 = arith.constant 0 : i32
    %c0_i32_0 = arith.constant 0 : i32
    %c0_i32_1 = arith.constant 0 : i32
    return %c0_i32, %c0_i32_0 : i32, i32
  }
  func.func @transform_5(%arg0: i32) -> (i32, i32, i32) {
    %c0_i32 = arith.constant 0 : i32
    %c0_i32_0 = arith.constant 0 : i32
    %c0_i32_1 = arith.constant 0 : i32
    return %arg0, %c0_i32, %c0_i32_0 : i32, i32, i32
  }
  func.func @transform_6(%arg0: i32) -> (i32, i32, i32) {
    %c0_i32 = arith.constant 0 : i32
    %c0_i32_0 = arith.constant 0 : i32
    %c0_i32_1 = arith.constant 0 : i32
    return %arg0, %c0_i32, %c0_i32_0 : i32, i32, i32
  }
}

</mosaic_0001>

<llo_original>
// kernel: up_conv_forward.5
$region0: #{up_conv_forward.5}
  #allocation0 [shape = 'u32[]', space=smem, size = 0x4, offset = 0x4, fixed_abs, tag = 'smem constant byte address 0x4 - core index']
  #allocation1 [shape = 'u32[144,128]{1,0:T(1,128)}', space=vmem, size = 0x12000, scoped, tag = 'internal scratch']
  %s0 = inlined_call_operand.vmem [shape: f32[2,8,256], index: 0, kind: input, shape index: {}]
  %s1 = inlined_call_operand.vmem [shape: f32[8,1], index: 1, kind: input, shape index: {}]
  %s2 = inlined_call_operand.vmem [shape: f32[8,1], index: 2, kind: input, shape index: {}]
  %s3 = inlined_call_operand.vmem [shape: f32[2,8,256], index: 3, kind: output, shape index: {}]
  %s4 = sld [smem:[#allocation0]]
  $region45: #{up_conv_forward.5} parent=0
    _
  %s6 = ssub.s32 1, %s4
  %s7 = scalar_select 0, %s6, %s4
  loop: start=0, step=1, limit=4
  $region2: #{up_conv_forward.5} parent=0 // loop_pre_header
    _
  $region3: #{up_conv_forward.5} parent=0 // loop_header
    %s9 = sphi 0, %s13
    %p10 = scmp.ge.s32.totalorder %s9, 4
    %s19 = sphi 0, %s21
    %s22 = sphi 0, %s19
    %s23 = sphi 0, %s22
    %s39 = sphi 0, %s23
    %s43 = sphi 0, %s43
    %s45 = sphi 0, %s43
    %s46 = sphi 0, %s45
    %s60 = sphi 0, %s46
    %s64 = sphi 0, %s64
    %s66 = sphi 0, %s64
    %s67 = sphi 0, %s66
    %s81 = sphi 0, %s67
    %s87 = sphi 0, %s89
    %s90 = sphi 0, %s87
    %s91 = sphi 0, %s90
    %s107 = sphi 0, %s91
  $region4: #{up_conv_forward.5} parent=0 // loop_header_branch
    %12 = sbr.rel (%p10) target = $region8
  $region5: #{up_conv_forward.5} parent=0 // loop_body
    %s14 = ssub.s32 %s9, 1
    %s15 = ssub.s32 %s9, 2
    %s16 = sadd.s32 %s9, 1
    %s17 = ssub.s32 %s9, %s16
    %p18 = scmp.eq.s32.totalorder %s17, 0
    %s20 = sadd.s32 %s19, 1
    %s21 = scalar_select %p18, %s19, %s20
    %p24 = pneg %p18
    %p25 = scmp.eq.s32.totalorder %s9, 1
    %p26 = por %p24, %p25
    %p27 = scmp.ne.s32.totalorder %s19, %s22
    %p28 = scmp.eq.s32.totalorder %s9, 0
    %p29 = por %p27, %p28
    %p30 = scmp.ne.s32.totalorder %s19, %s22
    %p31 = scmp.eq.s32.totalorder %s14, 1
    %p32 = por %p30, %p31
    %p33 = scmp.ne.s32.totalorder %s22, %s23
    %p34 = scmp.eq.s32.totalorder %s14, 0
    %p35 = por %p33, %p34
    %p36 = scmp.ne.s32.totalorder %s22, %s23
    %p37 = scmp.eq.s32.totalorder %s15, 1
    %p38 = por %p36, %p37
    %p40 = scmp.ne.s32.totalorder %s23, %s39
    %p41 = scmp.eq.s32.totalorder %s15, 0
    %p42 = por %p40, %p41
    %s44 = sadd.s32 %s43, 1
    %p47 = scmp.eq.s32.totalorder %s9, 1
    %p48 = scmp.ne.s32.totalorder %s43, %s45
    %p49 = scmp.eq.s32.totalorder %s9, 0
    %p50 = por %p48, %p49
    %p51 = scmp.ne.s32.totalorder %s43, %s45
    %p52 = scmp.eq.s32.totalorder %s14, 1
    %p53 = por %p51, %p52
    %p54 = scmp.ne.s32.totalorder %s45, %s46
    %p55 = scmp.eq.s32.totalorder %s14, 0
    %p56 = por %p54, %p55
    %p57 = scmp.ne.s32.totalorder %s45, %s46
    %p58 = scmp.eq.s32.totalorder %s15, 1
    %p59 = por %p57, %p58
    %p61 = scmp.ne.s32.totalorder %s46, %s60
    %p62 = scmp.eq.s32.totalorder %s15, 0
    %p63 = por %p61, %p62
    %s65 = sadd.s32 %s64, 1
    %p68 = scmp.eq.s32.totalorder %s9, 1
    %p69 = scmp.ne.s32.totalorder %s64, %s66
    %p70 = scmp.eq.s32.totalorder %s9, 0
    %p71 = por %p69, %p70
    %p72 = scmp.ne.s32.totalorder %s64, %s66
    %p73 = scmp.eq.s32.totalorder %s14, 1
    %p74 = por %p72, %p73
    %p75 = scmp.ne.s32.totalorder %s66, %s67
    %p76 = scmp.eq.s32.totalorder %s14, 0
    %p77 = por %p75, %p76
    %p78 = scmp.ne.s32.totalorder %s66, %s67
    %p79 = scmp.eq.s32.totalorder %s15, 1
    %p80 = por %p78, %p79
    %p82 = scmp.ne.s32.totalorder %s67, %s81
    %p83 = scmp.eq.s32.totalorder %s15, 0
    %p84 = por %p82, %p83
    %s85 = ssub.s32 %s9, %s16
    %p86 = scmp.eq.s32.totalorder %s85, 0
    %s88 = sadd.s32 %s87, 1
    %s89 = scalar_select %p86, %s87, %s88
    %p92 = pneg %p86
    %p93 = scmp.eq.s32.totalorder %s9, 1
    %p94 = por %p92, %p93
    %p95 = scmp.ne.s32.totalorder %s87, %s90
    %p96 = scmp.eq.s32.totalorder %s9, 0
    %p97 = por %p95, %p96
    %p98 = scmp.ne.s32.totalorder %s87, %s90
    %p99 = scmp.eq.s32.totalorder %s14, 1
    %p100 = por %p98, %p99
    %p101 = scmp.ne.s32.totalorder %s90, %s91
    %p102 = scmp.eq.s32.totalorder %s14, 0
    %p103 = por %p101, %p102
    %p104 = scmp.ne.s32.totalorder %s90, %s91
    %p105 = scmp.eq.s32.totalorder %s15, 1
    %p106 = por %p104, %p105
    %p108 = scmp.ne.s32.totalorder %s91, %s107
    %p109 = scmp.eq.s32.totalorder %s15, 0
    %p110 = por %p108, %p109
    %p111 = scmp.le.s32.totalorder 1, %s9
    %p112 = scmp.lt.s32.totalorder %s9, 3
    %p113 = pnand %p111, %p112
    %p114 = pneg %p113
    // Predicated region
    $region9: #{up_conv_forward.5} parent=5 // pred_check
      _
    $region10: #{up_conv_forward.5} parent=5 // pred_check_branch
      %116 = sbr.rel (%p113) target = $region12
    $region11: #{up_conv_forward.5} parent=5 // pred_region
      %s117 = ssub.s32 %s9, 1
      // Predicated region
      $region13: #{up_conv_forward.5} parent=11 // pred_check
        %p118 = pneg %p56
      $region14: #{up_conv_forward.5} parent=11 // pred_check_branch
        %120 = sbr.rel (%p118) target = $region16
      $region15: #{up_conv_forward.5} parent=11 // pred_region
        _
      $region16: #{up_conv_forward.5} parent=11 // pred_fallthru
        _
      // Predicated region
      $region17: #{up_conv_forward.5} parent=11 // pred_check
        %p121 = pneg %p77
      $region18: #{up_conv_forward.5} parent=11 // pred_check_branch
        %123 = sbr.rel (%p121) target = $region20
      $region19: #{up_conv_forward.5} parent=11 // pred_region
        _
      $region20: #{up_conv_forward.5} parent=11 // pred_fallthru
        _
    $region12: #{up_conv_forward.5} parent=5 // pred_fallthru
      _
    %p124 = scmp.lt.s32.totalorder %s9, 2
    // Predicated region
    $region21: #{up_conv_forward.5} parent=5 // pred_check
      %p125 = pneg %p124
    $region22: #{up_conv_forward.5} parent=5 // pred_check_branch
      %127 = sbr.rel (%p125) target = $region24
    $region23: #{up_conv_forward.5} parent=5 // pred_region
      // Predicated region
      $region25: #{up_conv_forward.5} parent=23 // pred_check
        %p128 = pneg %p29
      $region26: #{up_conv_forward.5} parent=23 // pred_check_branch
        %130 = sbr.rel (%p128) target = $region28
      $region27: #{up_conv_forward.5} parent=23 // pred_region
        %p131 = scmp.lt.s32.totalorder %s9, 1
        %s132 = scalar_select %p131, %s9, 1
        %s133 = smul.addr %s132, 2
        %s134 = smul.addr %s133, 8
        %s135 = scalar_lea.vmem %s0, %s134
      $region28: #{up_conv_forward.5} parent=23 // pred_fallthru
        _
    $region24: #{up_conv_forward.5} parent=5 // pred_fallthru
      _
    %p136 = scmp.le.s32.totalorder 1, %s9
    %p137 = scmp.lt.s32.totalorder %s9, 3
    %p138 = pnand %p136, %p137
    %p139 = pneg %p138
    // Predicated region
    $region29: #{up_conv_forward.5} parent=5 // pred_check
      _
    $region30: #{up_conv_forward.5} parent=5 // pred_check_branch
      %141 = sbr.rel (%p138) target = $region32
    $region31: #{up_conv_forward.5} parent=5 // pred_region
      %s142 = ssub.s32 %s9, 1
      %p143 = scmp.lt.s32.totalorder %s14, 1
      %s144 = scalar_select %p143, %s14, 1
      %s145 = smul.addr %s144, 2
      %s146 = smul.addr %s145, 8
      %s147 = scalar_lea.vmem %s0, %s146
      %p148 = pneg %p35
      %p149 = pneg %p32
      %p150 = pneg %p56
      %p151 = pneg %p53
      %p152 = pneg %p77
      %p153 = pneg %p74
      %p154 = pneg %p103
      %p155 = pneg %p100
      %p156 = scmp.lt.s32.totalorder %s14, 1
      %s157 = scalar_select %p156, %s14, 1
      %s158 = smul.addr %s157, 2
      %s159 = smul.addr %s158, 8
      %s160 = scalar_lea.vmem %s3, %s159
      %p161 = scmp.lt.s32.totalorder %s14, 1
      %s162 = scalar_select %p161, %s14, 1
      %s163 = smul.addr %s162, 2
      %s164 = smul.addr %s163, 8
      %s165 = scalar_lea.vmem %s0, %s164
      %p166 = scmp.lt.s32.totalorder %s14, 1
      %s167 = scalar_select %p166, %s14, 1
      %s168 = smul.addr %s167, 2
      %s169 = smul.addr %s168, 8
      %s170 = scalar_lea.vmem %s3, %s169
      %v171 = vld [vmem:[%s165] sm:$0xff]
      %v172 = vld [vmem:[%s165 + $0x8] sm:$0xff]
      %v173 = vld [vmem:[%s1] sm:$0xff]
      %175 = vset.pattern.permute.xlu0 0
      %176 = vperm.xlu0 %175, %v173
      %v177 = vpop.permute.xlu0 %176
      %v179 = vmul.f32 %v171, %v177
      %v180 = vmul.f32 %v172, %v177
      %v181 = vld [vmem:[%s2] sm:$0xff]
      %183 = vset.pattern.permute.xlu0 0
      %184 = vperm.xlu0 %183, %v181
      %v185 = vpop.permute.xlu0 %184
      %v187 = vadd.f32 %v179, %v185
      %v188 = vadd.f32 %v180, %v185
      %v189 = vmax.f32 %v187, 0.0
      %v190 = vmax.f32 %v188, 0.0
      %191 = vst [vmem:[%s170] sm:$0xff] %v189
      %192 = vst [vmem:[%s170 + $0x8] sm:$0xff] %v190
      %p193 = scmp.lt.s32.totalorder %s14, 1
      %s194 = scalar_select %p193, %s14, 1
      %s195 = smul.addr %s194, 2
      %s196 = smul.addr %s195, 8
      %s197 = scalar_lea.vmem %s3, %s196
      // Predicated region
      $region33: #{up_conv_forward.5} parent=31 // pred_check
        %p198 = pneg %p100
      $region34: #{up_conv_forward.5} parent=31 // pred_check_branch
        %200 = sbr.rel (%p198) target = $region36
      $region35: #{up_conv_forward.5} parent=31 // pred_region
        _
      $region36: #{up_conv_forward.5} parent=31 // pred_fallthru
        _
    $region32: #{up_conv_forward.5} parent=5 // pred_fallthru
      _
    %p201 = scmp.le.s32.totalorder 2, %s9
    // Predicated region
    $region37: #{up_conv_forward.5} parent=5 // pred_check
      %p202 = pneg %p201
    $region38: #{up_conv_forward.5} parent=5 // pred_check_branch
      %204 = sbr.rel (%p202) target = $region40
    $region39: #{up_conv_forward.5} parent=5 // pred_region
      %s205 = ssub.s32 %s9, 2
      // Predicated region
      $region41: #{up_conv_forward.5} parent=39 // pred_check
        %p206 = pneg %p106
      $region42: #{up_conv_forward.5} parent=39 // pred_check_branch
        %208 = sbr.rel (%p206) target = $region44
      $region43: #{up_conv_forward.5} parent=39 // pred_region
        %p209 = scmp.lt.s32.totalorder %s15, 1
        %s210 = scalar_select %p209, %s15, 1
        %s211 = smul.addr %s210, 2
        %s212 = smul.addr %s211, 8
        %s213 = scalar_lea.vmem %s3, %s212
      $region44: #{up_conv_forward.5} parent=39 // pred_fallthru
        _
    $region40: #{up_conv_forward.5} parent=5 // pred_fallthru
      _
  $region6: #{up_conv_forward.5} parent=0 // loop_footer
    %s13 = sadd.s32 1, %s9
  $region7: #{up_conv_forward.5} parent=0 // loop_footer_branch
    %8 = sbr.rel target = $region3
  $region8: #{up_conv_forward.5} parent=0 // loop_exit
    _

// kernel: up_conv_forward.4
$region0: #{up_conv_forward.4}
  #allocation0 [shape = 'u32[]', space=smem, size = 0x4, offset = 0x4, fixed_abs, tag = 'smem constant byte address 0x4 - core index']
  #allocation1 [shape = 'u32[144,128]{1,0:T(1,128)}', space=vmem, size = 0x12000, scoped, tag = 'internal scratch']
  %s0 = inlined_call_operand.vmem [shape: f32[2,8,256], index: 0, kind: input, shape index: {}]
  %s1 = inlined_call_operand.vmem [shape: f32[8,1], index: 1, kind: input, shape index: {}]
  %s2 = inlined_call_operand.vmem [shape: f32[8,1], index: 2, kind: input, shape index: {}]
  %s3 = inlined_call_operand.vmem [shape: f32[9,256], index: 3, kind: input, shape index: {}]
  %s4 = inlined_call_operand.vmem [shape: bf16[8,72], index: 4, kind: input, shape index: {}]
  %s5 = inlined_call_operand.vmem [shape: f32[2,8,256], index: 5, kind: output, shape index: {0}]
  %s6 = inlined_call_operand.vmem [shape: f32[2,8,2], index: 6, kind: output, shape index: {1}]
  %7 = xla_tuple %s5, %s6
  %s8 = sld [smem:[#allocation0]]
  $region61: #{up_conv_forward.4} parent=0
    _
  %s10 = ssub.s32 1, %s8
  %s11 = scalar_select 0, %s10, %s8
  loop: start=0, step=1, limit=4
  $region2: #{up_conv_forward.4} parent=0 // loop_pre_header
    _
  $region3: #{up_conv_forward.4} parent=0 // loop_header
    %s13 = sphi 0, %s17
    %p14 = scmp.ge.s32.totalorder %s13, 4
    %s23 = sphi 0, %s25
    %s26 = sphi 0, %s23
    %s27 = sphi 0, %s26
    %s43 = sphi 0, %s27
    %s47 = sphi 0, %s47
    %s49 = sphi 0, %s47
    %s50 = sphi 0, %s49
    %s64 = sphi 0, %s50
    %s68 = sphi 0, %s68
    %s70 = sphi 0, %s68
    %s71 = sphi 0, %s70
    %s85 = sphi 0, %s71
    %s89 = sphi 0, %s89
    %s91 = sphi 0, %s89
    %s92 = sphi 0, %s91
    %s106 = sphi 0, %s92
    %s110 = sphi 0, %s110
    %s112 = sphi 0, %s110
    %s113 = sphi 0, %s112
    %s127 = sphi 0, %s113
    %s133 = sphi 0, %s135
    %s136 = sphi 0, %s133
    %s137 = sphi 0, %s136
    %s153 = sphi 0, %s137
    %s159 = sphi 0, %s161
    %s162 = sphi 0, %s159
    %s163 = sphi 0, %s162
    %s179 = sphi 0, %s163
  $region4: #{up_conv_forward.4} parent=0 // loop_header_branch
    %16 = sbr.rel (%p14) target = $region8
  $region5: #{up_conv_forward.4} parent=0 // loop_body
    %s18 = ssub.s32 %s13, 1
    %s19 = ssub.s32 %s13, 2
    %s20 = sadd.s32 %s13, 1
    %s21 = ssub.s32 %s13, %s20
    %p22 = scmp.eq.s32.totalorder %s21, 0
    %s24 = sadd.s32 %s23, 1
    %s25 = scalar_select %p22, %s23, %s24
    %p28 = pneg %p22
    %p29 = scmp.eq.s32.totalorder %s13, 1
    %p30 = por %p28, %p29
    %p31 = scmp.ne.s32.totalorder %s23, %s26
    %p32 = scmp.eq.s32.totalorder %s13, 0
    %p33 = por %p31, %p32
    %p34 = scmp.ne.s32.totalorder %s23, %s26
    %p35 = scmp.eq.s32.totalorder %s18, 1
    %p36 = por %p34, %p35
    %p37 = scmp.ne.s32.totalorder %s26, %s27
    %p38 = scmp.eq.s32.totalorder %s18, 0
    %p39 = por %p37, %p38
    %p40 = scmp.ne.s32.totalorder %s26, %s27
    %p41 = scmp.eq.s32.totalorder %s19, 1
    %p42 = por %p40, %p41
    %p44 = scmp.ne.s32.totalorder %s27, %s43
    %p45 = scmp.eq.s32.totalorder %s19, 0
    %p46 = por %p44, %p45
    %s48 = sadd.s32 %s47, 1
    %p51 = scmp.eq.s32.totalorder %s13, 1
    %p52 = scmp.ne.s32.totalorder %s47, %s49
    %p53 = scmp.eq.s32.totalorder %s13, 0
    %p54 = por %p52, %p53
    %p55 = scmp.ne.s32.totalorder %s47, %s49
    %p56 = scmp.eq.s32.totalorder %s18, 1
    %p57 = por %p55, %p56
    %p58 = scmp.ne.s32.totalorder %s49, %s50
    %p59 = scmp.eq.s32.totalorder %s18, 0
    %p60 = por %p58, %p59
    %p61 = scmp.ne.s32.totalorder %s49, %s50
    %p62 = scmp.eq.s32.totalorder %s19, 1
    %p63 = por %p61, %p62
    %p65 = scmp.ne.s32.totalorder %s50, %s64
    %p66 = scmp.eq.s32.totalorder %s19, 0
    %p67 = por %p65, %p66
    %s69 = sadd.s32 %s68, 1
    %p72 = scmp.eq.s32.totalorder %s13, 1
    %p73 = scmp.ne.s32.totalorder %s68, %s70
    %p74 = scmp.eq.s32.totalorder %s13, 0
    %p75 = por %p73, %p74
    %p76 = scmp.ne.s32.totalorder %s68, %s70
    %p77 = scmp.eq.s32.totalorder %s18, 1
    %p78 = por %p76, %p77
    %p79 = scmp.ne.s32.totalorder %s70, %s71
    %p80 = scmp.eq.s32.totalorder %s18, 0
    %p81 = por %p79, %p80
    %p82 = scmp.ne.s32.totalorder %s70, %s71
    %p83 = scmp.eq.s32.totalorder %s19, 1
    %p84 = por %p82, %p83
    %p86 = scmp.ne.s32.totalorder %s71, %s85
    %p87 = scmp.eq.s32.totalorder %s19, 0
    %p88 = por %p86, %p87
    %s90 = sadd.s32 %s89, 1
    %p93 = scmp.eq.s32.totalorder %s13, 1
    %p94 = scmp.ne.s32.totalorder %s89, %s91
    %p95 = scmp.eq.s32.totalorder %s13, 0
    %p96 = por %p94, %p95
    %p97 = scmp.ne.s32.totalorder %s89, %s91
    %p98 = scmp.eq.s32.totalorder %s18, 1
    %p99 = por %p97, %p98
    %p100 = scmp.ne.s32.totalorder %s91, %s92
    %p101 = scmp.eq.s32.totalorder %s18, 0
    %p102 = por %p100, %p101
    %p103 = scmp.ne.s32.totalorder %s91, %s92
    %p104 = scmp.eq.s32.totalorder %s19, 1
    %p105 = por %p103, %p104
    %p107 = scmp.ne.s32.totalorder %s92, %s106
    %p108 = scmp.eq.s32.totalorder %s19, 0
    %p109 = por %p107, %p108
    %s111 = sadd.s32 %s110, 1
    %p114 = scmp.eq.s32.totalorder %s13, 1
    %p115 = scmp.ne.s32.totalorder %s110, %s112
    %p116 = scmp.eq.s32.totalorder %s13, 0
    %p117 = por %p115, %p116
    %p118 = scmp.ne.s32.totalorder %s110, %s112
    %p119 = scmp.eq.s32.totalorder %s18, 1
    %p120 = por %p118, %p119
    %p121 = scmp.ne.s32.totalorder %s112, %s113
    %p122 = scmp.eq.s32.totalorder %s18, 0
    %p123 = por %p121, %p122
    %p124 = scmp.ne.s32.totalorder %s112, %s113
    %p125 = scmp.eq.s32.totalorder %s19, 1
    %p126 = por %p124, %p125
    %p128 = scmp.ne.s32.totalorder %s113, %s127
    %p129 = scmp.eq.s32.totalorder %s19, 0
    %p130 = por %p128, %p129
    %s131 = ssub.s32 %s13, %s20
    %p132 = scmp.eq.s32.totalorder %s131, 0
    %s134 = sadd.s32 %s133, 1
    %s135 = scalar_select %p132, %s133, %s134
    %p138 = pneg %p132
    %p139 = scmp.eq.s32.totalorder %s13, 1
    %p140 = por %p138, %p139
    %p141 = scmp.ne.s32.totalorder %s133, %s136
    %p142 = scmp.eq.s32.totalorder %s13, 0
    %p143 = por %p141, %p142
    %p144 = scmp.ne.s32.totalorder %s133, %s136
    %p145 = scmp.eq.s32.totalorder %s18, 1
    %p146 = por %p144, %p145
    %p147 = scmp.ne.s32.totalorder %s136, %s137
    %p148 = scmp.eq.s32.totalorder %s18, 0
    %p149 = por %p147, %p148
    %p150 = scmp.ne.s32.totalorder %s136, %s137
    %p151 = scmp.eq.s32.totalorder %s19, 1
    %p152 = por %p150, %p151
    %p154 = scmp.ne.s32.totalorder %s137, %s153
    %p155 = scmp.eq.s32.totalorder %s19, 0
    %p156 = por %p154, %p155
    %s157 = ssub.s32 %s13, %s20
    %p158 = scmp.eq.s32.totalorder %s157, 0
    %s160 = sadd.s32 %s159, 1
    %s161 = scalar_select %p158, %s159, %s160
    %p164 = pneg %p158
    %p165 = scmp.eq.s32.totalorder %s13, 1
    %p166 = por %p164, %p165
    %p167 = scmp.ne.s32.totalorder %s159, %s162
    %p168 = scmp.eq.s32.totalorder %s13, 0
    %p169 = por %p167, %p168
    %p170 = scmp.ne.s32.totalorder %s159, %s162
    %p171 = scmp.eq.s32.totalorder %s18, 1
    %p172 = por %p170, %p171
    %p173 = scmp.ne.s32.totalorder %s162, %s163
    %p174 = scmp.eq.s32.totalorder %s18, 0
    %p175 = por %p173, %p174
    %p176 = scmp.ne.s32.totalorder %s162, %s163
    %p177 = scmp.eq.s32.totalorder %s19, 1
    %p178 = por %p176, %p177
    %p180 = scmp.ne.s32.totalorder %s163, %s179
    %p181 = scmp.eq.s32.totalorder %s19, 0
    %p182 = por %p180, %p181
    %p183 = scmp.le.s32.totalorder 1, %s13
    %p184 = scmp.lt.s32.totalorder %s13, 3
    %p185 = pnand %p183, %p184
    %p186 = pneg %p185
    // Predicated region
    $region9: #{up_conv_forward.4} parent=5 // pred_check
      _
    $region10: #{up_conv_forward.4} parent=5 // pred_check_branch
      %188 = sbr.rel (%p185) target = $region12
    $region11: #{up_conv_forward.4} parent=5 // pred_region
      %s189 = ssub.s32 %s13, 1
      // Predicated region
      $region13: #{up_conv_forward.4} parent=11 // pred_check
        %p190 = pneg %p60
      $region14: #{up_conv_forward.4} parent=11 // pred_check_branch
        %192 = sbr.rel (%p190) target = $region16
      $region15: #{up_conv_forward.4} parent=11 // pred_region
        _
      $region16: #{up_conv_forward.4} parent=11 // pred_fallthru
        _
      // Predicated region
      $region17: #{up_conv_forward.4} parent=11 // pred_check
        %p193 = pneg %p81
      $region18: #{up_conv_forward.4} parent=11 // pred_check_branch
        %195 = sbr.rel (%p193) target = $region20
      $region19: #{up_conv_forward.4} parent=11 // pred_region
        _
      $region20: #{up_conv_forward.4} parent=11 // pred_fallthru
        _
      // Predicated region
      $region21: #{up_conv_forward.4} parent=11 // pred_check
        %p196 = pneg %p102
      $region22: #{up_conv_forward.4} parent=11 // pred_check_branch
        %198 = sbr.rel (%p196) target = $region24
      $region23: #{up_conv_forward.4} parent=11 // pred_region
        _
      $region24: #{up_conv_forward.4} parent=11 // pred_fallthru
        _
      // Predicated region
      $region25: #{up_conv_forward.4} parent=11 // pred_check
        %p199 = pneg %p123
      $region26: #{up_conv_forward.4} parent=11 // pred_check_branch
        %201 = sbr.rel (%p199) target = $region28
      $region27: #{up_conv_forward.4} parent=11 // pred_region
        _
      $region28: #{up_conv_forward.4} parent=11 // pred_fallthru
        _
    $region12: #{up_conv_forward.4} parent=5 // pred_fallthru
      _
    %p202 = scmp.lt.s32.totalorder %s13, 2
    // Predicated region
    $region29: #{up_conv_forward.4} parent=5 // pred_check
      %p203 = pneg %p202
    $region30: #{up_conv_forward.4} parent=5 // pred_check_branch
      %205 = sbr.rel (%p203) target = $region32
    $region31: #{up_conv_forward.4} parent=5 // pred_region
      // Predicated region
      $region33: #{up_conv_forward.4} parent=31 // pred_check
        %p206 = pneg %p33
      $region34: #{up_conv_forward.4} parent=31 // pred_check_branch
        %208 = sbr.rel (%p206) target = $region36
      $region35: #{up_conv_forward.4} parent=31 // pred_region
        %p209 = scmp.lt.s32.totalorder %s13, 1
        %s210 = scalar_select %p209, %s13, 1
        %s211 = smul.addr %s210, 2
        %s212 = smul.addr %s211, 8
        %s213 = scalar_lea.vmem %s0, %s212
      $region36: #{up_conv_forward.4} parent=31 // pred_fallthru
        _
    $region32: #{up_conv_forward.4} parent=5 // pred_fallthru
      _
    %p214 = scmp.le.s32.totalorder 1, %s13
    %p215 = scmp.lt.s32.totalorder %s13, 3
    %p216 = pnand %p214, %p215
    %p217 = pneg %p216
    // Predicated region
    $region37: #{up_conv_forward.4} parent=5 // pred_check
      _
    $region38: #{up_conv_forward.4} parent=5 // pred_check_branch
      %219 = sbr.rel (%p216) target = $region40
    $region39: #{up_conv_forward.4} parent=5 // pred_region
      %s220 = ssub.s32 %s13, 1
      %p221 = scmp.lt.s32.totalorder %s18, 1
      %s222 = scalar_select %p221, %s18, 1
      %s223 = smul.addr %s222, 2
      %s224 = smul.addr %s223, 8
      %s225 = scalar_lea.vmem %s0, %s224
      %p226 = pneg %p39
      %p227 = pneg %p36
      %p228 = pneg %p60
      %p229 = pneg %p57
      %p230 = pneg %p81
      %p231 = pneg %p78
      %p232 = pneg %p102
      %p233 = pneg %p99
      %p234 = pneg %p123
      %p235 = pneg %p120
      %p236 = pneg %p149
      %p237 = pneg %p146
      %p238 = scmp.lt.s32.totalorder %s18, 1
      %s239 = scalar_select %p238, %s18, 1
      %s240 = smul.addr %s239, 2
      %s241 = smul.addr %s240, 8
      %s242 = scalar_lea.vmem %s5, %s241
      %p243 = pneg %p175
      %p244 = pneg %p172
      %p245 = scmp.lt.s32.totalorder %s18, 1
      %s246 = scalar_select %p245, %s18, 1
      %s247 = smul.addr %s246, 8
      %s248 = scalar_lea.vmem %s6, %s247
      %p249 = scmp.lt.s32.totalorder %s18, 1
      %s250 = scalar_select %p249, %s18, 1
      %s251 = smul.addr %s250, 2
      %s252 = smul.addr %s251, 8
      %s253 = scalar_lea.vmem %s0, %s252
      %p254 = scmp.lt.s32.totalorder %s18, 1
      %s255 = scalar_select %p254, %s18, 1
      %s256 = smul.addr %s255, 2
      %s257 = smul.addr %s256, 8
      %s258 = scalar_lea.vmem %s5, %s257
      %p259 = scmp.lt.s32.totalorder %s18, 1
      %s260 = scalar_select %p259, %s18, 1
      %s261 = smul.addr %s260, 8
      %s262 = scalar_lea.vmem %s6, %s261
      %v264 = vld [vmem:[%s253] sm:$0xff]
      %v265 = vld [vmem:[%s253 + $0x8] sm:$0xff]
      %v266 = vld [vmem:[%s1] sm:$0xff]
      %268 = vset.pattern.permute.xlu0 0
      %269 = vperm.xlu0 %268, %v266
      %v270 = vpop.permute.xlu0 %269
      %v272 = vmul.f32 %v264, %v270
      %v273 = vmul.f32 %v265, %v270
      %v274 = vld [vmem:[%s2] sm:$0xff]
      %276 = vset.pattern.permute.xlu0 0
      %277 = vperm.xlu0 %276, %v274
      %v278 = vpop.permute.xlu0 %277
      %v280 = vadd.f32 %v272, %v278
      %v281 = vadd.f32 %v273, %v278
      %v282 = vmax.f32 %v280, 0.0
      %v283 = vmax.f32 %v281, 0.0
      %v284 = vld [vmem:[%s3] sm:$0xff]
      %v285 = vld [vmem:[%s3 + $0x8] sm:$0xff]
      %v286 = vld [vmem:[%s3 + $0x10] sm:$0x1]
      %v287 = vld [vmem:[%s3 + $0x18] sm:$0x1]
      %289 = vrot.lane.b32.xlu0 %v283, 17
      %v290 = vpop.permute.xlu0 %289
      %293 = vrot.lane.b32.xlu0 %v282, 17
      %v294 = vpop.permute.xlu0 %293
      %vm295 = vcmask 138240
      %v296 = vsel %vm295, %v294, %v290
      %v299 = vsel %vm295, %v290, %v294
      %v300 = vlaneseq
      %v301 = vshrl.u32 %v300, 7
      %v302 = vsub.s32 0, %v301
      %v303 = vrot.slane %v284, %v302
      %v304 = vlaneseq
      %v305 = vshrl.u32 %v304, 7
      %v306 = vsub.s32 0, %v305
      %v307 = vrot.slane %v285, %v306
      %v308 = vmul.f32 %v299, %v303
      %v309 = vmul.f32 %v296, %v307
      %310 = vrot.lane.b32.xlu0 %v283, 16
      %v311 = vpop.permute.xlu0 %310
      %313 = vrot.lane.b32.xlu0 %v282, 16
      %v314 = vpop.permute.xlu0 %313
      %vm315 = vcmask 130048
      %v316 = vsel %vm315, %v314, %v311
      %v319 = vsel %vm315, %v311, %v314
      %v320 = vlaneseq
      %v321 = vshrl.u32 %v320, 7
      %v322 = vsub.s32 1, %v321
      %v323 = vrot.slane %v284, %v322
      %v324 = vlaneseq
      %v325 = vshrl.u32 %v324, 7
      %v326 = vsub.s32 1, %v325
      %v327 = vrot.slane %v285, %v326
      %v328 = vmul.f32 %v319, %v323
      %v329 = vmul.f32 %v316, %v327
      %330 = vrot.lane.b32.xlu0 %v283, 15
      %v331 = vpop.permute.xlu0 %330
      %333 = vrot.lane.b32.xlu0 %v282, 15
      %v334 = vpop.permute.xlu0 %333
      %vm335 = vcmask 121856
      %v336 = vsel %vm335, %v334, %v331
      %v339 = vsel %vm335, %v331, %v334
      %v340 = vlaneseq
      %v341 = vshrl.u32 %v340, 7
      %v342 = vsub.s32 2, %v341
      %v343 = vrot.slane %v284, %v342
      %v344 = vlaneseq
      %v345 = vshrl.u32 %v344, 7
      %v346 = vsub.s32 2, %v345
      %v347 = vrot.slane %v285, %v346
      %v348 = vmul.f32 %v339, %v343
      %v349 = vmul.f32 %v336, %v347
      %350 = vrot.lane.b32.xlu0 %v283, 1
      %v351 = vpop.permute.xlu0 %350
      %353 = vrot.lane.b32.xlu0 %v282, 1
      %v354 = vpop.permute.xlu0 %353
      %vm355 = vcmask 7168
      %v356 = vsel %vm355, %v354, %v351
      %v359 = vsel %vm355, %v351, %v354
      %v360 = vlaneseq
      %v361 = vshrl.u32 %v360, 7
      %v362 = vsub.s32 3, %v361
      %v363 = vrot.slane %v284, %v362
      %v364 = vlaneseq
      %v365 = vshrl.u32 %v364, 7
      %v366 = vsub.s32 3, %v365
      %v367 = vrot.slane %v285, %v366
      %v368 = vmul.f32 %v359, %v363
      %v369 = vmul.f32 %v356, %v367
      %v370 = vlaneseq
      %v371 = vshrl.u32 %v370, 7
      %v372 = vsub.s32 4, %v371
      %v373 = vrot.slane %v284, %v372
      %v374 = vlaneseq
      %v375 = vshrl.u32 %v374, 7
      %v376 = vsub.s32 4, %v375
      %v377 = vrot.slane %v285, %v376
      %v378 = vmul.f32 %v282, %v373
      %v379 = vmul.f32 %v283, %v377
      %380 = vrot.lane.b32.xlu0 %v282, 127
      %v381 = vpop.permute.xlu0 %380
      %382 = vrot.lane.b32.xlu0 %v283, 127
      %v383 = vpop.permute.xlu0 %382
      %vm384 = vcmask 1039360
      %v385 = vsel %vm384, %v381, %v383
      %v389 = vsel %vm384, %v383, %v381
      %v390 = vlaneseq
      %v391 = vshrl.u32 %v390, 7
      %v392 = vsub.s32 5, %v391
      %v393 = vrot.slane %v284, %v392
      %v394 = vlaneseq
      %v395 = vshrl.u32 %v394, 7
      %v396 = vsub.s32 5, %v395
      %v397 = vrot.slane %v285, %v396
      %v398 = vmul.f32 %v385, %v393
      %v399 = vmul.f32 %v389, %v397
      %400 = vrot.lane.b32.xlu0 %v282, 113
      %v401 = vpop.permute.xlu0 %400
      %402 = vrot.lane.b32.xlu0 %v283, 113
      %v403 = vpop.permute.xlu0 %402
      %vm404 = vcmask 924672
      %v405 = vsel %vm404, %v401, %v403
      %v409 = vsel %vm404, %v403, %v401
      %v410 = vlaneseq
      %v411 = vshrl.u32 %v410, 7
      %v412 = vsub.s32 6, %v411
      %v413 = vrot.slane %v284, %v412
      %v414 = vlaneseq
      %v415 = vshrl.u32 %v414, 7
      %v416 = vsub.s32 6, %v415
      %v417 = vrot.slane %v285, %v416
      %v418 = vmul.f32 %v405, %v413
      %v419 = vmul.f32 %v409, %v417
      %420 = vrot.lane.b32.xlu0 %v282, 112
      %v421 = vpop.permute.xlu0 %420
      %422 = vrot.lane.b32.xlu0 %v283, 112
      %v423 = vpop.permute.xlu0 %422
      %vm424 = vcmask 916480
      %v425 = vsel %vm424, %v421, %v423
      %v429 = vsel %vm424, %v423, %v421
      %v430 = vlaneseq
      %v431 = vshrl.u32 %v430, 7
      %v432 = vsub.s32 7, %v431
      %v433 = vrot.slane %v284, %v432
      %v434 = vlaneseq
      %v435 = vshrl.u32 %v434, 7
      %v436 = vsub.s32 7, %v435
      %v437 = vrot.slane %v285, %v436
      %v438 = vmul.f32 %v425, %v433
      %v439 = vmul.f32 %v429, %v437
      %440 = vrot.lane.b32.xlu0 %v282, 111
      %v441 = vpop.permute.xlu0 %440
      %442 = vrot.lane.b32.xlu0 %v283, 111
      %v443 = vpop.permute.xlu0 %442
      %vm444 = vcmask 908288
      %v445 = vsel %vm444, %v441, %v443
      %v449 = vsel %vm444, %v443, %v441
      %v450 = vlaneseq
      %v451 = vshrl.u32 %v450, 7
      %v452 = vsub.s32 0, %v451
      %v453 = vrot.slane %v286, %v452
      %v454 = vlaneseq
      %v455 = vshrl.u32 %v454, 7
      %v456 = vsub.s32 0, %v455
      %v457 = vrot.slane %v287, %v456
      %v458 = vmul.f32 %v445, %v453
      %v459 = vmul.f32 %v449, %v457
      %v460 = vld [vmem:[%s4] sm:$0xf]
      %v461 = vpack.c.bf16 %v328, %v308
      %v462 = vpack.c.bf16 %v329, %v309
      %v463 = vpack.c.bf16 %v368, %v348
      %v464 = vpack.c.bf16 %v369, %v349
      %v465 = vpack.c.bf16 %v398, %v378
      %v466 = vpack.c.bf16 %v399, %v379
      %v467 = vpack.c.bf16 %v438, %v418
      %v468 = vpack.c.bf16 %v439, %v419
      %v469 = vpack.c.bf16 %v458, %v458
      %v470 = vpack.c.bf16 %v459, %v459
      %vm471 = vcmask 588800
      %v473 = vsel %vm471, %v460, 0
      %vm475 = vcmask 1043456
      %v477 = vsel %vm475, %v469, 0
      %v480 = vsel %vm475, %v470, 0
      %482 = vmatprep.subr.bf16.mxu0 %v462
      %483 = vmatpush1.bf16.msra.mxu0 %v461
      %484 = vmatprep.subr.bf16.mxu0 %v464
      %485 = vmatpush1.bf16.msra.mxu0 %v463
      %486 = vmatprep.subr.bf16.mxu0 %v466
      %487 = vmatpush1.bf16.msra.mxu0 %v465
      %488 = vmatprep.subr.bf16.mxu0 %v468
      %489 = vmatpush1.bf16.msra.mxu0 %v467
      %490 = vmatprep.subr.bf16.mxu0 %v480
      %491 = vmatpush1.bf16.msra.mxu0 %v477
      %492 = vmatprep.subr.bf16.mxu0 0
      %493 = vmatpush1.bf16.msra.mxu0 0
      %494 = vmatprep.subr.bf16.mxu0 0
      %495 = vmatpush1.bf16.msra.mxu0 0
      %496 = vmatprep.subr.bf16.mxu0 0
      %497 = vmatpush1.bf16.msra.mxu0 0
      %498 = vmatprep.subr.bf16.mxu0 0
      %499 = vmatpush1.bf16.msra.mxu0 0
      %500 = vmatprep.subr.bf16.mxu0 0
      %501 = vmatpush1.bf16.msra.mxu0 0
      %502 = vmatprep.subr.bf16.mxu0 0
      %503 = vmatpush1.bf16.msra.mxu0 0
      %504 = vmatprep.subr.bf16.mxu0 0
      %505 = vmatpush1.bf16.msra.mxu0 0
      %506 = vmatprep.subr.bf16.mxu0 0
      %507 = vmatpush1.bf16.msra.mxu0 0
      %508 = vmatprep.subr.bf16.mxu0 0
      %509 = vmatpush1.bf16.msra.mxu0 0
      %510 = vmatprep.subr.bf16.mxu0 0
      %511 = vmatpush1.bf16.msra.mxu0 0
      %512 = vmatprep.subr.bf16.mxu0 0
      %513 = vmatpush1.bf16.msra.mxu0 0
      %514 = vmatprep.mubr.bf16.mxu0 0
      %515 = vmatmul.mubr.bf16.gmra.mrb[0].mxu0 %v473
      %v516 = vpop.f32.mrb[0].mxu0
      %v517 = vadd.f32 0.0, %v516
      %v518 = vpop.f32.mrb[0].mxu0
      %v519 = vadd.f32 0.0, %v518
      %v520 = vpop.f32.mrb[0].mxu0
      %v521 = vpop.f32.mrb[0].mxu0
      %522 = vdwg.mxu0
      %523 = vst [vmem:[%s258] sm:$0xff] %v517
      %524 = vst [vmem:[%s258 + $0x8] sm:$0xff] %v519
      %v525 = vadd.f32 %v517, %v519
      %526 = vadd.xlane.f32.xlu0 %v525
      %v527 = vpop.xlane.xlu0 %526
      %v528 = vmul.f32 %v517, %v517
      %v529 = vmul.f32 %v519, %v519
      %v530 = vadd.f32 %v528, %v529
      %531 = vadd.xlane.f32.xlu0 %v530
      %v532 = vpop.xlane.xlu0 %531
      %v533 = vsel %vm355, %v527, %v532
      %vm534 = vcmask 15360
      %535 = vst.msk [vmem:[%s262] sm:$0xff] %vm534, %v533
      %p536 = scmp.lt.s32.totalorder %s18, 1
      %s537 = scalar_select %p536, %s18, 1
      %s538 = smul.addr %s537, 2
      %s539 = smul.addr %s538, 8
      %s540 = scalar_lea.vmem %s5, %s539
      %p541 = scmp.lt.s32.totalorder %s18, 1
      %s542 = scalar_select %p541, %s18, 1
      %s543 = smul.addr %s542, 8
      %s544 = scalar_lea.vmem %s6, %s543
      // Predicated region
      $region41: #{up_conv_forward.4} parent=39 // pred_check
        %p545 = pneg %p146
      $region42: #{up_conv_forward.4} parent=39 // pred_check_branch
        %547 = sbr.rel (%p545) target = $region44
      $region43: #{up_conv_forward.4} parent=39 // pred_region
        _
      $region44: #{up_conv_forward.4} parent=39 // pred_fallthru
        _
      // Predicated region
      $region45: #{up_conv_forward.4} parent=39 // pred_check
        %p548 = pneg %p172
      $region46: #{up_conv_forward.4} parent=39 // pred_check_branch
        %550 = sbr.rel (%p548) target = $region48
      $region47: #{up_conv_forward.4} parent=39 // pred_region
        _
      $region48: #{up_conv_forward.4} parent=39 // pred_fallthru
        _
    $region40: #{up_conv_forward.4} parent=5 // pred_fallthru
      _
    %p551 = scmp.le.s32.totalorder 2, %s13
    // Predicated region
    $region49: #{up_conv_forward.4} parent=5 // pred_check
      %p552 = pneg %p551
    $region50: #{up_conv_forward.4} parent=5 // pred_check_branch
      %554 = sbr.rel (%p552) target = $region52
    $region51: #{up_conv_forward.4} parent=5 // pred_region
      %s555 = ssub.s32 %s13, 2
      // Predicated region
      $region53: #{up_conv_forward.4} parent=51 // pred_check
        %p556 = pneg %p152
      $region54: #{up_conv_forward.4} parent=51 // pred_check_branch
        %558 = sbr.rel (%p556) target = $region56
      $region55: #{up_conv_forward.4} parent=51 // pred_region
        %p559 = scmp.lt.s32.totalorder %s19, 1
        %s560 = scalar_select %p559, %s19, 1
        %s561 = smul.addr %s560, 2
        %s562 = smul.addr %s561, 8
        %s563 = scalar_lea.vmem %s5, %s562
      $region56: #{up_conv_forward.4} parent=51 // pred_fallthru
        _
      // Predicated region
      $region57: #{up_conv_forward.4} parent=51 // pred_check
        %p564 = pneg %p178
      $region58: #{up_conv_forward.4} parent=51 // pred_check_branch
        %566 = sbr.rel (%p564) target = $region60
      $region59: #{up_conv_forward.4} parent=51 // pred_region
        %p567 = scmp.lt.s32.totalorder %s19, 1
        %s568 = scalar_select %p567, %s19, 1
        %s569 = smul.addr %s568, 8
        %s570 = scalar_lea.vmem %s6, %s569
      $region60: #{up_conv_forward.4} parent=51 // pred_fallthru
        _
    $region52: #{up_conv_forward.4} parent=5 // pred_fallthru
      _
  $region6: #{up_conv_forward.4} parent=0 // loop_footer
    %s17 = sadd.s32 1, %s13
  $region7: #{up_conv_forward.4} parent=0 // loop_footer_branch
    %12 = sbr.rel target = $region3
  $region8: #{up_conv_forward.4} parent=0 // loop_exit
    _

// kernel: up_conv_forward.3
$region0: #{up_conv_forward.3}
  #allocation0 [shape = 'u32[]', space=smem, size = 0x4, offset = 0x4, fixed_abs, tag = 'smem constant byte address 0x4 - core index']
  #allocation1 [shape = 'u32[144,128]{1,0:T(1,128)}', space=vmem, size = 0x12000, scoped, tag = 'internal scratch']
  %s0 = inlined_call_operand.vmem [shape: f32[2,4,64], index: 0, kind: input, shape index: {}]
  %s1 = inlined_call_operand.vmem [shape: f32[2,4,256], index: 1, kind: input, shape index: {}]
  %s2 = inlined_call_operand.vmem [shape: f32[64,256], index: 2, kind: input, shape index: {}]
  %s3 = inlined_call_operand.vmem [shape: f32[9,256], index: 3, kind: input, shape index: {}]
  %s4 = inlined_call_operand.vmem [shape: bf16[8,72], index: 4, kind: input, shape index: {}]
  %s5 = inlined_call_operand.vmem [shape: f32[2,8,256], index: 5, kind: output, shape index: {0}]
  %s6 = inlined_call_operand.vmem [shape: f32[2,8,2], index: 6, kind: output, shape index: {1}]
  %7 = xla_tuple %s5, %s6
  %s8 = sld [smem:[#allocation0]]
  $region61: #{up_conv_forward.3} parent=0
    _
  %s10 = ssub.s32 1, %s8
  %s11 = scalar_select 0, %s10, %s8
  loop: start=0, step=1, limit=4
  $region2: #{up_conv_forward.3} parent=0 // loop_pre_header
    _
  $region3: #{up_conv_forward.3} parent=0 // loop_header
    %s13 = sphi 0, %s17
    %p14 = scmp.ge.s32.totalorder %s13, 4
    %s23 = sphi 0, %s25
    %s26 = sphi 0, %s23
    %s27 = sphi 0, %s26
    %s43 = sphi 0, %s27
    %s49 = sphi 0, %s51
    %s52 = sphi 0, %s49
    %s53 = sphi 0, %s52
    %s69 = sphi 0, %s53
    %s73 = sphi 0, %s73
    %s75 = sphi 0, %s73
    %s76 = sphi 0, %s75
    %s90 = sphi 0, %s76
    %s94 = sphi 0, %s94
    %s96 = sphi 0, %s94
    %s97 = sphi 0, %s96
    %s111 = sphi 0, %s97
    %s115 = sphi 0, %s115
    %s117 = sphi 0, %s115
    %s118 = sphi 0, %s117
    %s132 = sphi 0, %s118
    %s138 = sphi 0, %s140
    %s141 = sphi 0, %s138
    %s142 = sphi 0, %s141
    %s158 = sphi 0, %s142
    %s164 = sphi 0, %s166
    %s167 = sphi 0, %s164
    %s168 = sphi 0, %s167
    %s184 = sphi 0, %s168
  $region4: #{up_conv_forward.3} parent=0 // loop_header_branch
    %16 = sbr.rel (%p14) target = $region8
  $region5: #{up_conv_forward.3} parent=0 // loop_body
    %s18 = ssub.s32 %s13, 1
    %s19 = ssub.s32 %s13, 2
    %s20 = sadd.s32 %s13, 1
    %s21 = ssub.s32 %s13, %s20
    %p22 = scmp.eq.s32.totalorder %s21, 0
    %s24 = sadd.s32 %s23, 1
    %s25 = scalar_select %p22, %s23, %s24
    %p28 = pneg %p22
    %p29 = scmp.eq.s32.totalorder %s13, 1
    %p30 = por %p28, %p29
    %p31 = scmp.ne.s32.totalorder %s23, %s26
    %p32 = scmp.eq.s32.totalorder %s13, 0
    %p33 = por %p31, %p32
    %p34 = scmp.ne.s32.totalorder %s23, %s26
    %p35 = scmp.eq.s32.totalorder %s18, 1
    %p36 = por %p34, %p35
    %p37 = scmp.ne.s32.totalorder %s26, %s27
    %p38 = scmp.eq.s32.totalorder %s18, 0
    %p39 = por %p37, %p38
    %p40 = scmp.ne.s32.totalorder %s26, %s27
    %p41 = scmp.eq.s32.totalorder %s19, 1
    %p42 = por %p40, %p41
    %p44 = scmp.ne.s32.totalorder %s27, %s43
    %p45 = scmp.eq.s32.totalorder %s19, 0
    %p46 = por %p44, %p45
    %s47 = ssub.s32 %s13, %s20
    %p48 = scmp.eq.s32.totalorder %s47, 0
    %s50 = sadd.s32 %s49, 1
    %s51 = scalar_select %p48, %s49, %s50
    %p54 = pneg %p48
    %p55 = scmp.eq.s32.totalorder %s13, 1
    %p56 = por %p54, %p55
    %p57 = scmp.ne.s32.totalorder %s49, %s52
    %p58 = scmp.eq.s32.totalorder %s13, 0
    %p59 = por %p57, %p58
    %p60 = scmp.ne.s32.totalorder %s49, %s52
    %p61 = scmp.eq.s32.totalorder %s18, 1
    %p62 = por %p60, %p61
    %p63 = scmp.ne.s32.totalorder %s52, %s53
    %p64 = scmp.eq.s32.totalorder %s18, 0
    %p65 = por %p63, %p64
    %p66 = scmp.ne.s32.totalorder %s52, %s53
    %p67 = scmp.eq.s32.totalorder %s19, 1
    %p68 = por %p66, %p67
    %p70 = scmp.ne.s32.totalorder %s53, %s69
    %p71 = scmp.eq.s32.totalorder %s19, 0
    %p72 = por %p70, %p71
    %s74 = sadd.s32 %s73, 1
    %p77 = scmp.eq.s32.totalorder %s13, 1
    %p78 = scmp.ne.s32.totalorder %s73, %s75
    %p79 = scmp.eq.s32.totalorder %s13, 0
    %p80 = por %p78, %p79
    %p81 = scmp.ne.s32.totalorder %s73, %s75
    %p82 = scmp.eq.s32.totalorder %s18, 1
    %p83 = por %p81, %p82
    %p84 = scmp.ne.s32.totalorder %s75, %s76
    %p85 = scmp.eq.s32.totalorder %s18, 0
    %p86 = por %p84, %p85
    %p87 = scmp.ne.s32.totalorder %s75, %s76
    %p88 = scmp.eq.s32.totalorder %s19, 1
    %p89 = por %p87, %p88
    %p91 = scmp.ne.s32.totalorder %s76, %s90
    %p92 = scmp.eq.s32.totalorder %s19, 0
    %p93 = por %p91, %p92
    %s95 = sadd.s32 %s94, 1
    %p98 = scmp.eq.s32.totalorder %s13, 1
    %p99 = scmp.ne.s32.totalorder %s94, %s96
    %p100 = scmp.eq.s32.totalorder %s13, 0
    %p101 = por %p99, %p100
    %p102 = scmp.ne.s32.totalorder %s94, %s96
    %p103 = scmp.eq.s32.totalorder %s18, 1
    %p104 = por %p102, %p103
    %p105 = scmp.ne.s32.totalorder %s96, %s97
    %p106 = scmp.eq.s32.totalorder %s18, 0
    %p107 = por %p105, %p106
    %p108 = scmp.ne.s32.totalorder %s96, %s97
    %p109 = scmp.eq.s32.totalorder %s19, 1
    %p110 = por %p108, %p109
    %p112 = scmp.ne.s32.totalorder %s97, %s111
    %p113 = scmp.eq.s32.totalorder %s19, 0
    %p114 = por %p112, %p113
    %s116 = sadd.s32 %s115, 1
    %p119 = scmp.eq.s32.totalorder %s13, 1
    %p120 = scmp.ne.s32.totalorder %s115, %s117
    %p121 = scmp.eq.s32.totalorder %s13, 0
    %p122 = por %p120, %p121
    %p123 = scmp.ne.s32.totalorder %s115, %s117
    %p124 = scmp.eq.s32.totalorder %s18, 1
    %p125 = por %p123, %p124
    %p126 = scmp.ne.s32.totalorder %s117, %s118
    %p127 = scmp.eq.s32.totalorder %s18, 0
    %p128 = por %p126, %p127
    %p129 = scmp.ne.s32.totalorder %s117, %s118
    %p130 = scmp.eq.s32.totalorder %s19, 1
    %p131 = por %p129, %p130
    %p133 = scmp.ne.s32.totalorder %s118, %s132
    %p134 = scmp.eq.s32.totalorder %s19, 0
    %p135 = por %p133, %p134
    %s136 = ssub.s32 %s13, %s20
    %p137 = scmp.eq.s32.totalorder %s136, 0
    %s139 = sadd.s32 %s138, 1
    %s140 = scalar_select %p137, %s138, %s139
    %p143 = pneg %p137
    %p144 = scmp.eq.s32.totalorder %s13, 1
    %p145 = por %p143, %p144
    %p146 = scmp.ne.s32.totalorder %s138, %s141
    %p147 = scmp.eq.s32.totalorder %s13, 0
    %p148 = por %p146, %p147
    %p149 = scmp.ne.s32.totalorder %s138, %s141
    %p150 = scmp.eq.s32.totalorder %s18, 1
    %p151 = por %p149, %p150
    %p152 = scmp.ne.s32.totalorder %s141, %s142
    %p153 = scmp.eq.s32.totalorder %s18, 0
    %p154 = por %p152, %p153
    %p155 = scmp.ne.s32.totalorder %s141, %s142
    %p156 = scmp.eq.s32.totalorder %s19, 1
    %p157 = por %p155, %p156
    %p159 = scmp.ne.s32.totalorder %s142, %s158
    %p160 = scmp.eq.s32.totalorder %s19, 0
    %p161 = por %p159, %p160
    %s162 = ssub.s32 %s13, %s20
    %p163 = scmp.eq.s32.totalorder %s162, 0
    %s165 = sadd.s32 %s164, 1
    %s166 = scalar_select %p163, %s164, %s165
    %p169 = pneg %p163
    %p170 = scmp.eq.s32.totalorder %s13, 1
    %p171 = por %p169, %p170
    %p172 = scmp.ne.s32.totalorder %s164, %s167
    %p173 = scmp.eq.s32.totalorder %s13, 0
    %p174 = por %p172, %p173
    %p175 = scmp.ne.s32.totalorder %s164, %s167
    %p176 = scmp.eq.s32.totalorder %s18, 1
    %p177 = por %p175, %p176
    %p178 = scmp.ne.s32.totalorder %s167, %s168
    %p179 = scmp.eq.s32.totalorder %s18, 0
    %p180 = por %p178, %p179
    %p181 = scmp.ne.s32.totalorder %s167, %s168
    %p182 = scmp.eq.s32.totalorder %s19, 1
    %p183 = por %p181, %p182
    %p185 = scmp.ne.s32.totalorder %s168, %s184
    %p186 = scmp.eq.s32.totalorder %s19, 0
    %p187 = por %p185, %p186
    %p188 = scmp.le.s32.totalorder 1, %s13
    %p189 = scmp.lt.s32.totalorder %s13, 3
    %p190 = pnand %p188, %p189
    %p191 = pneg %p190
    // Predicated region
    $region9: #{up_conv_forward.3} parent=5 // pred_check
      _
    $region10: #{up_conv_forward.3} parent=5 // pred_check_branch
      %193 = sbr.rel (%p190) target = $region12
    $region11: #{up_conv_forward.3} parent=5 // pred_region
      %s194 = ssub.s32 %s13, 1
      // Predicated region
      $region13: #{up_conv_forward.3} parent=11 // pred_check
        %p195 = pneg %p86
      $region14: #{up_conv_forward.3} parent=11 // pred_check_branch
        %197 = sbr.rel (%p195) target = $region16
      $region15: #{up_conv_forward.3} parent=11 // pred_region
        _
      $region16: #{up_conv_forward.3} parent=11 // pred_fallthru
        _
      // Predicated region
      $region17: #{up_conv_forward.3} parent=11 // pred_check
        %p198 = pneg %p107
      $region18: #{up_conv_forward.3} parent=11 // pred_check_branch
        %200 = sbr.rel (%p198) target = $region20
      $region19: #{up_conv_forward.3} parent=11 // pred_region
        _
      $region20: #{up_conv_forward.3} parent=11 // pred_fallthru
        _
      // Predicated region
      $region21: #{up_conv_forward.3} parent=11 // pred_check
        %p201 = pneg %p128
      $region22: #{up_conv_forward.3} parent=11 // pred_check_branch
        %203 = sbr.rel (%p201) target = $region24
      $region23: #{up_conv_forward.3} parent=11 // pred_region
        _
      $region24: #{up_conv_forward.3} parent=11 // pred_fallthru
        _
    $region12: #{up_conv_forward.3} parent=5 // pred_fallthru
      _
    %p204 = scmp.lt.s32.totalorder %s13, 2
    // Predicated region
    $region25: #{up_conv_forward.3} parent=5 // pred_check
      %p205 = pneg %p204
    $region26: #{up_conv_forward.3} parent=5 // pred_check_branch
      %207 = sbr.rel (%p205) target = $region28
    $region27: #{up_conv_forward.3} parent=5 // pred_region
      // Predicated region
      $region29: #{up_conv_forward.3} parent=27 // pred_check
        %p208 = pneg %p33
      $region30: #{up_conv_forward.3} parent=27 // pred_check_branch
        %210 = sbr.rel (%p208) target = $region32
      $region31: #{up_conv_forward.3} parent=27 // pred_region
        %p211 = scmp.lt.s32.totalorder %s13, 1
        %s212 = scalar_select %p211, %s13, 1
        %s213 = smul.addr %s212, 4
        %s214 = scalar_lea.vmem %s0, %s213
      $region32: #{up_conv_forward.3} parent=27 // pred_fallthru
        _
      // Predicated region
      $region33: #{up_conv_forward.3} parent=27 // pred_check
        %p215 = pneg %p59
      $region34: #{up_conv_forward.3} parent=27 // pred_check_branch
        %217 = sbr.rel (%p215) target = $region36
      $region35: #{up_conv_forward.3} parent=27 // pred_region
        %p218 = scmp.lt.s32.totalorder %s13, 1
        %s219 = scalar_select %p218, %s13, 1
        %s220 = smul.addr %s219, 2
        %s221 = smul.addr %s220, 4
        %s222 = scalar_lea.vmem %s1, %s221
      $region36: #{up_conv_forward.3} parent=27 // pred_fallthru
        _
    $region28: #{up_conv_forward.3} parent=5 // pred_fallthru
      _
    %p223 = scmp.le.s32.totalorder 1, %s13
    %p224 = scmp.lt.s32.totalorder %s13, 3
    %p225 = pnand %p223, %p224
    %p226 = pneg %p225
    // Predicated region
    $region37: #{up_conv_forward.3} parent=5 // pred_check
      _
    $region38: #{up_conv_forward.3} parent=5 // pred_check_branch
      %228 = sbr.rel (%p225) target = $region40
    $region39: #{up_conv_forward.3} parent=5 // pred_region
      %s229 = ssub.s32 %s13, 1
      %p230 = scmp.lt.s32.totalorder %s18, 1
      %s231 = scalar_select %p230, %s18, 1
      %s232 = smul.addr %s231, 4
      %s233 = scalar_lea.vmem %s0, %s232
      %p234 = pneg %p39
      %p235 = pneg %p36
      %p236 = scmp.lt.s32.totalorder %s18, 1
      %s237 = scalar_select %p236, %s18, 1
      %s238 = smul.addr %s237, 2
      %s239 = smul.addr %s238, 4
      %s240 = scalar_lea.vmem %s1, %s239
      %p241 = pneg %p65
      %p242 = pneg %p62
      %p243 = pneg %p86
      %p244 = pneg %p83
      %p245 = pneg %p107
      %p246 = pneg %p104
      %p247 = pneg %p128
      %p248 = pneg %p125
      %p249 = pneg %p154
      %p250 = pneg %p151
      %p251 = scmp.lt.s32.totalorder %s18, 1
      %s252 = scalar_select %p251, %s18, 1
      %s253 = smul.addr %s252, 2
      %s254 = smul.addr %s253, 8
      %s255 = scalar_lea.vmem %s5, %s254
      %p256 = pneg %p180
      %p257 = pneg %p177
      %p258 = scmp.lt.s32.totalorder %s18, 1
      %s259 = scalar_select %p258, %s18, 1
      %s260 = smul.addr %s259, 8
      %s261 = scalar_lea.vmem %s6, %s260
      %p262 = scmp.lt.s32.totalorder %s18, 1
      %s263 = scalar_select %p262, %s18, 1
      %s264 = smul.addr %s263, 4
      %s265 = scalar_lea.vmem %s0, %s264
      %p266 = scmp.lt.s32.totalorder %s18, 1
      %s267 = scalar_select %p266, %s18, 1
      %s268 = smul.addr %s267, 2
      %s269 = smul.addr %s268, 4
      %s270 = scalar_lea.vmem %s1, %s269
      %p271 = scmp.lt.s32.totalorder %s18, 1
      %s272 = scalar_select %p271, %s18, 1
      %s273 = smul.addr %s272, 2
      %s274 = smul.addr %s273, 8
      %s275 = scalar_lea.vmem %s5, %s274
      %p276 = scmp.lt.s32.totalorder %s18, 1
      %s277 = scalar_select %p276, %s18, 1
      %s278 = smul.addr %s277, 8
      %s279 = scalar_lea.vmem %s6, %s278
      %v281 = vld [vmem:[%s265] sm:$0xf]
      %v282 = vld [vmem:[%s2] sm:$0xff]
      %v283 = vld [vmem:[%s2 + $0x8] sm:$0xff]
      %v284 = vld [vmem:[%s2 + $0x10] sm:$0xff]
      %v285 = vld [vmem:[%s2 + $0x18] sm:$0xff]
      %v286 = vld [vmem:[%s2 + $0x20] sm:$0xff]
      %v287 = vld [vmem:[%s2 + $0x28] sm:$0xff]
      %v288 = vld [vmem:[%s2 + $0x30] sm:$0xff]
      %v289 = vld [vmem:[%s2 + $0x38] sm:$0xff]
      %v290 = vld [vmem:[%s2 + $0x40] sm:$0xff]
      %v291 = vld [vmem:[%s2 + $0x48] sm:$0xff]
      %v292 = vld [vmem:[%s2 + $0x50] sm:$0xff]
      %v293 = vld [vmem:[%s2 + $0x58] sm:$0xff]
      %v294 = vld [vmem:[%s2 + $0x60] sm:$0xff]
      %v295 = vld [vmem:[%s2 + $0x68] sm:$0xff]
      %v296 = vld [vmem:[%s2 + $0x70] sm:$0xff]
      %v297 = vld [vmem:[%s2 + $0x78] sm:$0xff]
      %vm298 = vcmask 523264
      %v300 = vsel %vm298, %v281, 0
      %302 = vmatprep.subr.mxu0 %v283
      %303 = vmatpush1.msra.mxu0 %v282
      %304 = vmatprep.subr.mxu0 %v285
      %305 = vmatpush1.msra.mxu0 %v284
      %306 = vmatprep.subr.mxu0 %v287
      %307 = vmatpush1.msra.mxu0 %v286
      %308 = vmatprep.subr.mxu0 %v289
      %309 = vmatpush1.msra.mxu0 %v288
      %310 = vmatprep.subr.mxu0 %v291
      %311 = vmatpush1.msra.mxu0 %v290
      %312 = vmatprep.subr.mxu0 %v293
      %313 = vmatpush1.msra.mxu0 %v292
      %314 = vmatprep.subr.mxu0 %v295
      %315 = vmatpush1.msra.mxu0 %v294
      %316 = vmatprep.subr.mxu0 %v297
      %317 = vmatpush1.msra.mxu0 %v296
      %318 = vmatprep.subr.mxu0 0.0
      %319 = vmatpush1.msra.mxu0 0.0
      %320 = vmatprep.subr.mxu0 0.0
      %321 = vmatpush1.msra.mxu0 0.0
      %322 = vmatprep.subr.mxu0 0.0
      %323 = vmatpush1.msra.mxu0 0.0
      %324 = vmatprep.subr.mxu0 0.0
      %325 = vmatpush1.msra.mxu0 0.0
      %326 = vmatprep.subr.mxu0 0.0
      %327 = vmatpush1.msra.mxu0 0.0
      %328 = vmatprep.subr.mxu0 0.0
      %329 = vmatpush1.msra.mxu0 0.0
      %330 = vmatprep.subr.mxu0 0.0
      %331 = vmatpush1.msra.mxu0 0.0
      %332 = vmatprep.subr.mxu0 0.0
      %333 = vmatpush1.msra.mxu0 0.0
      %334 = vmatprep.subr.mxu0 0.0
      %335 = vmatpush1.msra.mxu0 0.0
      %336 = vmatprep.subr.mxu0 0.0
      %337 = vmatpush1.msra.mxu0 0.0
      %338 = vmatprep.subr.mxu0 0.0
      %339 = vmatpush1.msra.mxu0 0.0
      %340 = vmatprep.subr.mxu0 0.0
      %341 = vmatpush1.msra.mxu0 0.0
      %342 = vmatprep.subr.mxu0 0.0
      %343 = vmatpush1.msra.mxu0 0.0
      %344 = vmatprep.subr.mxu0 0.0
      %345 = vmatpush1.msra.mxu0 0.0
      %346 = vmatprep.subr.mxu0 0.0
      %347 = vmatpush1.msra.mxu0 0.0
      %348 = vmatprep.subr.mxu0 0.0
      %349 = vmatpush1.msra.mxu0 0.0
      %350 = vmatprep.subr.mxu0 0.0
      %351 = vmatpush1.msra.mxu0 0.0
      %352 = vmatprep.subr.mxu0 0.0
      %353 = vmatpush1.msra.mxu0 0.0
      %354 = vmatprep.subr.mxu0 0.0
      %355 = vmatpush1.msra.mxu0 0.0
      %356 = vmatprep.subr.mxu0 0.0
      %357 = vmatpush1.msra.mxu0 0.0
      %358 = vmatprep.subr.mxu0 0.0
      %359 = vmatpush1.msra.mxu0 0.0
      %360 = vmatprep.subr.mxu0 0.0
      %361 = vmatpush1.msra.mxu0 0.0
      %362 = vmatprep.subr.mxu0 0.0
      %363 = vmatpush1.msra.mxu0 0.0
      %364 = vmatprep.subr.mxu0 0.0
      %365 = vmatpush1.msra.mxu0 0.0
      %366 = vmatprep.mubr.f32.mxu0 0.0
      %367 = vmatmul.mubr.f32.gmra.mrb[0].mxu0 %v300
      %v368 = vpop.f32.mrb[0].mxu0
      %v369 = vadd.f32 0.0, %v368
      %v370 = vpop.f32.mrb[0].mxu0
      %v371 = vadd.f32 0.0, %v370
      %372 = vdwg.mxu0
      %v373 = vld [vmem:[%s270] sm:$0xff]
      %v375 = vcombine.high %v373, %v373
      %v379 = vrot.slane %v369, 4
      %v380 = vrot.slane %v371, 4
      %vm383 = vcmask 1043456
      %v384 = vsel %vm383, %v373, %v379
      %v385 = vsel %vm383, %v375, %v380
      %v386 = vld [vmem:[%s3] sm:$0xff]
      %v387 = vld [vmem:[%s3 + $0x8] sm:$0xff]
      %v388 = vld [vmem:[%s3 + $0x10] sm:$0x1]
      %v389 = vld [vmem:[%s3 + $0x18] sm:$0x1]
      %391 = vrot.lane.b32.xlu0 %v385, 17
      %v392 = vpop.permute.xlu0 %391
      %395 = vrot.lane.b32.xlu0 %v384, 17
      %v396 = vpop.permute.xlu0 %395
      %vm397 = vcmask 138240
      %v398 = vsel %vm397, %v396, %v392
      %v401 = vsel %vm397, %v392, %v396
      %v402 = vlaneseq
      %v403 = vshrl.u32 %v402, 7
      %v404 = vsub.s32 0, %v403
      %v405 = vrot.slane %v386, %v404
      %v406 = vlaneseq
      %v407 = vshrl.u32 %v406, 7
      %v408 = vsub.s32 0, %v407
      %v409 = vrot.slane %v387, %v408
      %v410 = vmul.f32 %v401, %v405
      %v411 = vmul.f32 %v398, %v409
      %412 = vrot.lane.b32.xlu0 %v385, 16
      %v413 = vpop.permute.xlu0 %412
      %415 = vrot.lane.b32.xlu0 %v384, 16
      %v416 = vpop.permute.xlu0 %415
      %vm417 = vcmask 130048
      %v418 = vsel %vm417, %v416, %v413
      %v421 = vsel %vm417, %v413, %v416
      %v422 = vlaneseq
      %v423 = vshrl.u32 %v422, 7
      %v424 = vsub.s32 1, %v423
      %v425 = vrot.slane %v386, %v424
      %v426 = vlaneseq
      %v427 = vshrl.u32 %v426, 7
      %v428 = vsub.s32 1, %v427
      %v429 = vrot.slane %v387, %v428
      %v430 = vmul.f32 %v421, %v425
      %v431 = vmul.f32 %v418, %v429
      %432 = vrot.lane.b32.xlu0 %v385, 15
      %v433 = vpop.permute.xlu0 %432
      %435 = vrot.lane.b32.xlu0 %v384, 15
      %v436 = vpop.permute.xlu0 %435
      %vm437 = vcmask 121856
      %v438 = vsel %vm437, %v436, %v433
      %v441 = vsel %vm437, %v433, %v436
      %v442 = vlaneseq
      %v443 = vshrl.u32 %v442, 7
      %v444 = vsub.s32 2, %v443
      %v445 = vrot.slane %v386, %v444
      %v446 = vlaneseq
      %v447 = vshrl.u32 %v446, 7
      %v448 = vsub.s32 2, %v447
      %v449 = vrot.slane %v387, %v448
      %v450 = vmul.f32 %v441, %v445
      %v451 = vmul.f32 %v438, %v449
      %452 = vrot.lane.b32.xlu0 %v385, 1
      %v453 = vpop.permute.xlu0 %452
      %455 = vrot.lane.b32.xlu0 %v384, 1
      %v456 = vpop.permute.xlu0 %455
      %vm457 = vcmask 7168
      %v458 = vsel %vm457, %v456, %v453
      %v461 = vsel %vm457, %v453, %v456
      %v462 = vlaneseq
      %v463 = vshrl.u32 %v462, 7
      %v464 = vsub.s32 3, %v463
      %v465 = vrot.slane %v386, %v464
      %v466 = vlaneseq
      %v467 = vshrl.u32 %v466, 7
      %v468 = vsub.s32 3, %v467
      %v469 = vrot.slane %v387, %v468
      %v470 = vmul.f32 %v461, %v465
      %v471 = vmul.f32 %v458, %v469
      %v472 = vlaneseq
      %v473 = vshrl.u32 %v472, 7
      %v474 = vsub.s32 4, %v473
      %v475 = vrot.slane %v386, %v474
      %v476 = vlaneseq
      %v477 = vshrl.u32 %v476, 7
      %v478 = vsub.s32 4, %v477
      %v479 = vrot.slane %v387, %v478
      %v480 = vmul.f32 %v384, %v475
      %v481 = vmul.f32 %v385, %v479
      %482 = vrot.lane.b32.xlu0 %v384, 127
      %v483 = vpop.permute.xlu0 %482
      %484 = vrot.lane.b32.xlu0 %v385, 127
      %v485 = vpop.permute.xlu0 %484
      %vm486 = vcmask 1039360
      %v487 = vsel %vm486, %v483, %v485
      %v491 = vsel %vm486, %v485, %v483
      %v492 = vlaneseq
      %v493 = vshrl.u32 %v492, 7
      %v494 = vsub.s32 5, %v493
      %v495 = vrot.slane %v386, %v494
      %v496 = vlaneseq
      %v497 = vshrl.u32 %v496, 7
      %v498 = vsub.s32 5, %v497
      %v499 = vrot.slane %v387, %v498
      %v500 = vmul.f32 %v487, %v495
      %v501 = vmul.f32 %v491, %v499
      %502 = vrot.lane.b32.xlu0 %v384, 113
      %v503 = vpop.permute.xlu0 %502
      %504 = vrot.lane.b32.xlu0 %v385, 113
      %v505 = vpop.permute.xlu0 %504
      %vm506 = vcmask 924672
      %v507 = vsel %vm506, %v503, %v505
      %v511 = vsel %vm506, %v505, %v503
      %v512 = vlaneseq
      %v513 = vshrl.u32 %v512, 7
      %v514 = vsub.s32 6, %v513
      %v515 = vrot.slane %v386, %v514
      %v516 = vlaneseq
      %v517 = vshrl.u32 %v516, 7
      %v518 = vsub.s32 6, %v517
      %v519 = vrot.slane %v387, %v518
      %v520 = vmul.f32 %v507, %v515
      %v521 = vmul.f32 %v511, %v519
      %522 = vrot.lane.b32.xlu0 %v384, 112
      %v523 = vpop.permute.xlu0 %522
      %524 = vrot.lane.b32.xlu0 %v385, 112
      %v525 = vpop.permute.xlu0 %524
      %vm526 = vcmask 916480
      %v527 = vsel %vm526, %v523, %v525
      %v531 = vsel %vm526, %v525, %v523
      %v532 = vlaneseq
      %v533 = vshrl.u32 %v532, 7
      %v534 = vsub.s32 7, %v533
      %v535 = vrot.slane %v386, %v534
      %v536 = vlaneseq
      %v537 = vshrl.u32 %v536, 7
      %v538 = vsub.s32 7, %v537
      %v539 = vrot.slane %v387, %v538
      %v540 = vmul.f32 %v527, %v535
      %v541 = vmul.f32 %v531, %v539
      %542 = vrot.lane.b32.xlu0 %v384, 111
      %v543 = vpop.permute.xlu0 %542
      %544 = vrot.lane.b32.xlu0 %v385, 111
      %v545 = vpop.permute.xlu0 %544
      %vm546 = vcmask 908288
      %v547 = vsel %vm546, %v543, %v545
      %v551 = vsel %vm546, %v545, %v543
      %v552 = vlaneseq
      %v553 = vshrl.u32 %v552, 7
      %v554 = vsub.s32 0, %v553
      %v555 = vrot.slane %v388, %v554
      %v556 = vlaneseq
      %v557 = vshrl.u32 %v556, 7
      %v558 = vsub.s32 0, %v557
      %v559 = vrot.slane %v389, %v558
      %v560 = vmul.f32 %v547, %v555
      %v561 = vmul.f32 %v551, %v559
      %v562 = vld [vmem:[%s4] sm:$0xf]
      %v563 = vpack.c.bf16 %v430, %v410
      %v564 = vpack.c.bf16 %v431, %v411
      %v565 = vpack.c.bf16 %v470, %v450
      %v566 = vpack.c.bf16 %v471, %v451
      %v567 = vpack.c.bf16 %v500, %v480
      %v568 = vpack.c.bf16 %v501, %v481
      %v569 = vpack.c.bf16 %v540, %v520
      %v570 = vpack.c.bf16 %v541, %v521
      %v571 = vpack.c.bf16 %v560, %v560
      %v572 = vpack.c.bf16 %v561, %v561
      %vm573 = vcmask 588800
      %v575 = vsel %vm573, %v562, 0
      %v578 = vsel %vm383, %v571, 0
      %v581 = vsel %vm383, %v572, 0
      %583 = vmatprep.subr.bf16.mxu0 %v564
      %584 = vmatpush1.bf16.msra.mxu0 %v563
      %585 = vmatprep.subr.bf16.mxu0 %v566
      %586 = vmatpush1.bf16.msra.mxu0 %v565
      %587 = vmatprep.subr.bf16.mxu0 %v568
      %588 = vmatpush1.bf16.msra.mxu0 %v567
      %589 = vmatprep.subr.bf16.mxu0 %v570
      %590 = vmatpush1.bf16.msra.mxu0 %v569
      %591 = vmatprep.subr.bf16.mxu0 %v581
      %592 = vmatpush1.bf16.msra.mxu0 %v578
      %593 = vmatprep.subr.bf16.mxu0 0
      %594 = vmatpush1.bf16.msra.mxu0 0
      %595 = vmatprep.subr.bf16.mxu0 0
      %596 = vmatpush1.bf16.msra.mxu0 0
      %597 = vmatprep.subr.bf16.mxu0 0
      %598 = vmatpush1.bf16.msra.mxu0 0
      %599 = vmatprep.subr.bf16.mxu0 0
      %600 = vmatpush1.bf16.msra.mxu0 0
      %601 = vmatprep.subr.bf16.mxu0 0
      %602 = vmatpush1.bf16.msra.mxu0 0
      %603 = vmatprep.subr.bf16.mxu0 0
      %604 = vmatpush1.bf16.msra.mxu0 0
      %605 = vmatprep.subr.bf16.mxu0 0
      %606 = vmatpush1.bf16.msra.mxu0 0
      %607 = vmatprep.subr.bf16.mxu0 0
      %608 = vmatpush1.bf16.msra.mxu0 0
      %609 = vmatprep.subr.bf16.mxu0 0
      %610 = vmatpush1.bf16.msra.mxu0 0
      %611 = vmatprep.subr.bf16.mxu0 0
      %612 = vmatpush1.bf16.msra.mxu0 0
      %613 = vmatprep.subr.bf16.mxu0 0
      %614 = vmatpush1.bf16.msra.mxu0 0
      %615 = vmatprep.mubr.bf16.mxu0 0
      %616 = vmatmul.mubr.bf16.gmra.mrb[0].mxu0 %v575
      %v617 = vpop.f32.mrb[0].mxu0
      %v618 = vadd.f32 0.0, %v617
      %v619 = vpop.f32.mrb[0].mxu0
      %v620 = vadd.f32 0.0, %v619
      %v621 = vpop.f32.mrb[0].mxu0
      %v622 = vpop.f32.mrb[0].mxu0
      %623 = vdwg.mxu0
      %624 = vst [vmem:[%s275] sm:$0xff] %v618
      %625 = vst [vmem:[%s275 + $0x8] sm:$0xff] %v620
      %v626 = vadd.f32 %v618, %v620
      %627 = vadd.xlane.f32.xlu0 %v626
      %v628 = vpop.xlane.xlu0 %627
      %v629 = vmul.f32 %v618, %v618
      %v630 = vmul.f32 %v620, %v620
      %v631 = vadd.f32 %v629, %v630
      %632 = vadd.xlane.f32.xlu0 %v631
      %v633 = vpop.xlane.xlu0 %632
      %v634 = vsel %vm457, %v628, %v633
      %vm635 = vcmask 15360
      %636 = vst.msk [vmem:[%s279] sm:$0xff] %vm635, %v634
      %p637 = scmp.lt.s32.totalorder %s18, 1
      %s638 = scalar_select %p637, %s18, 1
      %s639 = smul.addr %s638, 2
      %s640 = smul.addr %s639, 8
      %s641 = scalar_lea.vmem %s5, %s640
      %p642 = scmp.lt.s32.totalorder %s18, 1
      %s643 = scalar_select %p642, %s18, 1
      %s644 = smul.addr %s643, 8
      %s645 = scalar_lea.vmem %s6, %s644
      // Predicated region
      $region41: #{up_conv_forward.3} parent=39 // pred_check
        %p646 = pneg %p151
      $region42: #{up_conv_forward.3} parent=39 // pred_check_branch
        %648 = sbr.rel (%p646) target = $region44
      $region43: #{up_conv_forward.3} parent=39 // pred_region
        _
      $region44: #{up_conv_forward.3} parent=39 // pred_fallthru
        _
      // Predicated region
      $region45: #{up_conv_forward.3} parent=39 // pred_check
        %p649 = pneg %p177
      $region46: #{up_conv_forward.3} parent=39 // pred_check_branch
        %651 = sbr.rel (%p649) target = $region48
      $region47: #{up_conv_forward.3} parent=39 // pred_region
        _
      $region48: #{up_conv_forward.3} parent=39 // pred_fallthru
        _
    $region40: #{up_conv_forward.3} parent=5 // pred_fallthru
      _
    %p652 = scmp.le.s32.totalorder 2, %s13
    // Predicated region
    $region49: #{up_conv_forward.3} parent=5 // pred_check
      %p653 = pneg %p652
    $region50: #{up_conv_forward.3} parent=5 // pred_check_branch
      %655 = sbr.rel (%p653) target = $region52
    $region51: #{up_conv_forward.3} parent=5 // pred_region
      %s656 = ssub.s32 %s13, 2
      // Predicated region
      $region53: #{up_conv_forward.3} parent=51 // pred_check
        %p657 = pneg %p157
      $region54: #{up_conv_forward.3} parent=51 // pred_check_branch
        %659 = sbr.rel (%p657) target = $region56
      $region55: #{up_conv_forward.3} parent=51 // pred_region
        %p660 = scmp.lt.s32.totalorder %s19, 1
        %s661 = scalar_select %p660, %s19, 1
        %s662 = smul.addr %s661, 2
        %s663 = smul.addr %s662, 8
        %s664 = scalar_lea.vmem %s5, %s663
      $region56: #{up_conv_forward.3} parent=51 // pred_fallthru
        _
      // Predicated region
      $region57: #{up_conv_forward.3} parent=51 // pred_check
        %p665 = pneg %p183
      $region58: #{up_conv_forward.3} parent=51 // pred_check_branch
        %667 = sbr.rel (%p665) target = $region60
      $region59: #{up_conv_forward.3} parent=51 // pred_region
        %p668 = scmp.lt.s32.totalorder %s19, 1
        %s669 = scalar_select %p668, %s19, 1
        %s670 = smul.addr %s669, 8
        %s671 = scalar_lea.vmem %s6, %s670
      $region60: #{up_conv_forward.3} parent=51 // pred_fallthru
        _
    $region52: #{up_conv_forward.3} parent=5 // pred_fallthru
      _
  $region6: #{up_conv_forward.3} parent=0 // loop_footer
    %s17 = sadd.s32 1, %s13
  $region7: #{up_conv_forward.3} parent=0 // loop_footer_branch
    %12 = sbr.rel target = $region3
  $region8: #{up_conv_forward.3} parent=0 // loop_exit
    _

</llo_original>
